<compile_context>
chip_gen: v7x
topology: tpu7x:2x2x1
jax: 0.10.0
libtpu: 0.0.40
codegen_flags: <defaults>
</compile_context>

<pallas_src>
import numpy as np
import jax
import jax.numpy as jnp
from jax import lax
from jax.experimental import pallas as pl
from jax.experimental.pallas import tpu as pltpu


# ----------------------- small, module-consistent sizes ----------------------
VOCAB = 100
EMB = 16          # embedding_dim (== LSTM input size in the original module)
HID = 32          # hidden_dim
NUM_LABEL = 5
T = 8             # sequence length
B = 2             # batch size
GAZ = 0           # total gazetteer width (must be 0 for nn.LSTM(embedding_dim,...))


# ------------------------------- fused Pallas kernel --------------------------
def _bilstm_crf_kernel(x_ref, win_ref, bg_ref, whh_ref, wlab_ref, blab_ref,
                       start_ref, trans_ref, end_ref,
                       em_ref, tags_ref, best_ref,
                       xp_scr, h_scr, bp_scr):
    """Fused BiLSTM + emission projection + batched Viterbi + backtrace.

    x:[T*B, 2E] bf16 where cols 0:E = x[t], E:2E = x[T-1-t] (pre-reversed);
    win:[2E,8H] bf16 block-structured input weights; bg:[1,8H] f32;
    whh:[2H,8H] bf16 block-diagonal recurrent weights; wlab:[2H,L] f32;
    blab/start/end:[1,L]; trans:[L,L].
    Gate column order (fuse-time reorder): [i_f,i_b, f_f,f_b, o_f,o_b, g_f,g_b].
    Outputs: emissions em:[T*B,L] f32, decoded tags:[B,T] i32, best score:[B,1].
    Scratch: xp:[T*B,8H] f32, h:[T*B,2H] f32, bp:[T*B,L] i32 (VMEM only)."""
    bsz, seq_len = tags_ref.shape
    hid = whh_ref.shape[0] // 2
    two_h, four_h, six_h, eight_h = 2 * hid, 4 * hid, 6 * hid, 8 * hid
    nlab = trans_ref.shape[0]

    # ---- (1) hoisted input projection: ONE MXU matmul for all steps & dirs ---
    xp_scr[...] = (jnp.dot(x_ref[...], win_ref[...],
                           preferred_element_type=jnp.float32) + bg_ref[...])

    w_hh = whh_ref[...]                                    # [2H, 8H] bf16, loaded once

    # ---- (2) fused bidirectional recurrence (fwd lanes 0:H, bwd lanes H:2H) --
    h = jnp.zeros((bsz, two_h), jnp.float32)
    c = jnp.zeros((bsz, two_h), jnp.float32)
    for t in range(seq_len):                               # fully unrolled, static
        rt = seq_len - 1 - t
        hh = jnp.dot(h.astype(jnp.bfloat16), w_hh,
                     preferred_element_type=jnp.float32)   # [B, 8H]
        gates = hh + xp_scr[t * bsz:(t + 1) * bsz, :]      # one contiguous row block
        sig = jax.nn.sigmoid(gates[:, 0:six_h])            # one wide sigmoid (i,f,o)
        g = jnp.tanh(gates[:, six_h:eight_h])              # one tanh (g)
        i = sig[:, 0:two_h]
        f = sig[:, two_h:four_h]
        o = sig[:, four_h:six_h]
        c = f * c + i * g
        h = o * jnp.tanh(c)
        # fwd half belongs to time t, bwd half to time rt
        h_scr[t * bsz:(t + 1) * bsz, 0:hid] = h[:, 0:hid]
        h_scr[rt * bsz:(rt + 1) * bsz, hid:two_h] = h[:, hid:two_h]

    # ---- (3) emission projection: single [T*B,2H] @ [2H,L] dot ---------------
    em = (jnp.dot(h_scr[...], wlab_ref[...],
                  preferred_element_type=jnp.float32) + blab_ref[...])   # [T*B, L]
    em_ref[...] = em

    # ---- (4) batched Viterbi forward recursion -------------------------------
    trans = trans_ref[...]                                               # [L, L]
    prev_idx = lax.broadcasted_iota(jnp.int32, (bsz, nlab, nlab), 2)
    scores = start_ref[...] + em[0:bsz, :]                               # [B, L]
    for t in range(1, seq_len):
        # swt[b, j, k] = scores[b, k] + transitions[j, k]
        swt = scores[:, None, :] + trans[None, :, :]                     # [B, L, L]
        m = jnp.max(swt, axis=-1)                                        # [B, L]
        bp = jnp.min(jnp.where(swt >= m[:, :, None], prev_idx, nlab),
                     axis=-1).astype(jnp.int32)                          # first argmax
        bp_scr[t * bsz:(t + 1) * bsz, :] = bp
        scores = em[t * bsz:(t + 1) * bsz, :] + m
    final = scores + end_ref[...]                                        # [B, L]

    # ---- (5) on-device backtrace (no backpointer HBM round trip) -------------
    lab_iota = lax.broadcasted_iota(jnp.int32, (bsz, nlab), 1)
    t_iota = lax.broadcasted_iota(jnp.int32, (bsz, seq_len), 1)
    m_fin = jnp.max(final, axis=-1, keepdims=True)                       # [B, 1]
    best_ref[...] = m_fin
    cur = jnp.min(jnp.where(final >= m_fin, lab_iota, nlab),
                  axis=-1, keepdims=True).astype(jnp.int32)              # [B, 1]
    path = jnp.zeros((bsz, seq_len), jnp.int32)
    for t in range(seq_len - 1, 0, -1):
        path = jnp.where(t_iota == t, cur, path)                         # set col t
        bp_t = bp_scr[t * bsz:(t + 1) * bsz, :]                          # [B, L]
        cur = jnp.sum(jnp.where(lab_iota == cur, bp_t, 0),
                      axis=-1, keepdims=True).astype(jnp.int32)          # gather
    path = jnp.where(t_iota == 0, cur, path)
    tags_ref[...] = path


# ------------------------------ kernel wrapper ---------------------------------
def _vmem_spec():
    return pl.BlockSpec(memory_space=pltpu.MemorySpace.VMEM)


def fused_bilstm_crf(x_both, fused, seq_len, bsz):
    hid = fused["w_hh"].shape[0] // 2
    nlab = fused["trans"].shape[0]
    # TODO(synk): for large batches on v7x, add a grid over the batch dim with
    # dimension_semantics=("parallel",) to use both TensorCores; at B=2 the
    # gridless single-program kernel is the right shape.
    return pl.pallas_call(
        _bilstm_crf_kernel,
        out_shape=(jax.ShapeDtypeStruct((seq_len * bsz, nlab), jnp.float32),  # emissions
                   jax.ShapeDtypeStruct((bsz, seq_len), jnp.int32),           # tag paths
                   jax.ShapeDtypeStruct((bsz, 1), jnp.float32)),              # best scores
        in_specs=[_vmem_spec()] * 9,
        out_specs=(_vmem_spec(), _vmem_spec(), _vmem_spec()),
        scratch_shapes=[pltpu.VMEM((seq_len * bsz, 8 * hid), jnp.float32),    # x-proj
                        pltpu.VMEM((seq_len * bsz, 2 * hid), jnp.float32),    # hidden
                        pltpu.VMEM((seq_len * bsz, nlab), jnp.int32)],        # backptrs
    )(x_both, fused["w_in"], fused["b_gates"], fused["w_hh"],
      fused["w_lab"], fused["b_lab"], fused["start_t"], fused["trans"],
      fused["end_t"])


# ------------------------------ parameters ------------------------------------
def init_params(key):
    ks = jax.random.split(key, 12)
    sc_lstm = 1.0 / np.sqrt(HID)
    sc_lin = 1.0 / np.sqrt(2 * HID)

    def u(k, shape, s):
        return jax.random.uniform(k, shape, jnp.float32, -s, s)

    return {
        "embed": jax.random.normal(ks[0], (VOCAB, EMB), jnp.float32),
        # forward-direction LSTM (PyTorch gate order i, f, g, o along columns)
        "w_ih_f": u(ks[1], (EMB, 4 * HID), sc_lstm),
        "w_hh_f": u(ks[2], (HID, 4 * HID), sc_lstm),
        "b_f":    u(ks[3], (1, 4 * HID), sc_lstm),      # b_ih + b_hh merged
        # backward-direction LSTM
        "w_ih_b": u(ks[4], (EMB, 4 * HID), sc_lstm),
        "w_hh_b": u(ks[5], (HID, 4 * HID), sc_lstm),
        "b_b":    u(ks[6], (1, 4 * HID), sc_lstm),
        # CRF feature2labels + transitions
        "w_lab":  u(ks[7], (2 * HID, NUM_LABEL), sc_lin),
        "b_lab":  u(ks[8], (1, NUM_LABEL), sc_lin),
        "start_t": jax.random.normal(ks[9], (1, NUM_LABEL), jnp.float32),
        "trans":   jax.random.normal(ks[10], (NUM_LABEL, NUM_LABEL), jnp.float32),
        "end_t":   jax.random.normal(ks[11], (1, NUM_LABEL), jnp.float32),
    }


def fuse_params(p):
    """Pre-fuse / reorder the LSTM weights once (outside the forward path).

    Target gate-column order (8H wide): [i_f,i_b, f_f,f_b, o_f,o_b, g_f,g_b]
    -> sigmoid gates contiguous in cols 0:6H, tanh gate in cols 6H:8H, and the
    fwd/bwd halves of each gate match the [h_fwd | h_bwd] lane packing."""
    hid = HID

    def gate_chunks(m):      # PyTorch column order i, f, g, o
        return (m[:, 0:hid], m[:, hid:2 * hid],
                m[:, 2 * hid:3 * hid], m[:, 3 * hid:4 * hid])

    def interleave(mf, mb):
        i_f, f_f, g_f, o_f = gate_chunks(mf)
        i_b, f_b, g_b, o_b = gate_chunks(mb)
        return jnp.concatenate([i_f, i_b, f_f, f_b, o_f, o_b, g_f, g_b], axis=-1)

    zero_ih = jnp.zeros_like(p["w_ih_f"])
    zero_hh = jnp.zeros_like(p["w_hh_f"])
    # rows 0:E multiply x[t] (fwd cols only); rows E:2E multiply x[T-1-t] (bwd cols)
    w_in = jnp.concatenate([interleave(p["w_ih_f"], zero_ih),
                            interleave(zero_ih, p["w_ih_b"])], axis=0)   # [2E, 8H]
    # block-diagonal recurrent weight: rows 0:H = h_fwd -> fwd cols, rows H:2H = h_bwd
    w_hh = jnp.concatenate([interleave(p["w_hh_f"], zero_hh),
                            interleave(zero_hh, p["w_hh_b"])], axis=0)   # [2H, 8H]
    b_g = interleave(p["b_f"], p["b_b"])                                 # [1, 8H]
    return {
        "embed": p["embed"],
        "w_in": w_in.astype(jnp.bfloat16),        # bf16 MXU operands
        "w_hh": w_hh.astype(jnp.bfloat16),
        "b_gates": b_g.astype(jnp.float32),       # bias added post-matmul in f32
        "w_lab": p["w_lab"], "b_lab": p["b_lab"],
        "start_t": p["start_t"], "trans": p["trans"], "end_t": p["end_t"],
    }


# ------------------------------ full forward ----------------------------------
@jax.jit
def _device_forward(fused, sentence_ids, gazetteers):
    """Single device dispatch: embedding lookup + fused Pallas kernel."""
    word_emb = jnp.take(fused["embed"], sentence_ids, axis=0)       # [T,B,EMB]
    embeds = jnp.concatenate([word_emb, gazetteers], axis=-1)       # [T,B,EMB+GAZ]
    # TODO(synk): feature_dropout is identity at inference (eval mode); training-time
    # stochastic masking is not implemented here.
    t_len, bsz, feat = embeds.shape
    x_fwd = embeds.reshape(t_len * bsz, feat)
    x_bwd = embeds[::-1].reshape(t_len * bsz, feat)                 # pre-reversed
    x_both = jnp.concatenate([x_fwd, x_bwd], axis=-1).astype(jnp.bfloat16)  # [T*B,2E]
    em_flat, tags, best = fused_bilstm_crf(x_both, fused, t_len, bsz)
    return em_flat.reshape(t_len, bsz, -1), tags, best


def bilstm_crf_forward(fused, sentence_ids, gazetteers, lengths):
    """sentence_ids:[T,B] int32 (time-major; equal lengths == PackedSequence with
    constant batch_sizes). Returns ([(viterbi_score, tag_path)], emissions)."""
    emissions, tags, best = _device_forward(fused, sentence_ids, gazetteers)
    jax.block_until_ready((emissions, tags, best))                  # ONE host sync

    # TODO(synk): the batched in-kernel Viterbi + backtrace assume full-length
    # sequences (lengths[b] == T, i.e. constant batch_sizes); variable lengths
    # would need per-step length masking inside the kernel.
    tags_np = np.asarray(tags)                                      # [B, T] int32
    best_np = np.asarray(best)                                      # [B, 1] f32
    results = [(float(best_np[b, 0]), [int(v) for v in tags_np[b, :ln]])
               for b, ln in enumerate(lengths)]
    return results, emissions


# ------------------------------ references (numpy) -----------------------------
def reference_forward(params, sentence_ids, gazetteers, lengths):
    """Full f32 numpy re-implementation of the PyTorch module forward."""
    p = {k: np.asarray(v) for k, v in params.items()}
    ids = np.asarray(sentence_ids)
    x = np.concatenate([p["embed"][ids], np.asarray(gazetteers)], axis=-1)

    def run_dir(xseq, wih, whh, bias):
        tn, bn, _ = xseq.shape
        h = np.zeros((bn, HID), np.float32)
        c = np.zeros((bn, HID), np.float32)
        outs = []
        for t in range(tn):
            g = xseq[t] @ wih + h @ whh + bias
            i = 1.0 / (1.0 + np.exp(-g[:, :HID]))
            f = 1.0 / (1.0 + np.exp(-g[:, HID:2 * HID]))
            gg = np.tanh(g[:, 2 * HID:3 * HID])
            o = 1.0 / (1.0 + np.exp(-g[:, 3 * HID:]))
            c = f * c + i * gg
            h = o * np.tanh(c)
            outs.append(h)
        return np.stack(outs)

    hf = run_dir(x, p["w_ih_f"], p["w_hh_f"], p["b_f"])
    hb = run_dir(x[::-1], p["w_ih_b"], p["w_hh_b"], p["b_b"])[::-1]
    em = np.concatenate([hf, hb], -1) @ p["w_lab"] + p["b_lab"]          # [T,B,L]

    res = []
    for b in range(em.shape[1]):
        s, path = viterbi_np(em[:lengths[b], b, :], p["start_t"][0],
                             p["trans"], p["end_t"][0])
        res.append((s, path))
    return res, em


def viterbi_np(em_seq, start, trans, end):
    """Numpy Viterbi mirroring the kernel's op order exactly (f32)."""
    scores = start + em_seq[0]
    bps = []
    for t in range(1, em_seq.shape[0]):
        swt = scores + trans            # swt[j, k] = scores[k] + trans[j, k]
        bps.append(swt.argmax(-1))
        scores = em_seq[t] + swt.max(-1)
    scores = scores + end
    path = [int(scores.argmax())]
    for bp in reversed(bps):
        path.append(int(bp[path[-1]]))
    path.reverse()
    return float(scores.max()), path


# ---------------------------------- main ---------------------------------------
if __name__ == "__main__":
    key = jax.random.PRNGKey(0)
    kp, ki = jax.random.split(key)
    params = init_params(kp)
    fused = fuse_params(params)

    sentence_ids = jax.random.randint(ki, (T, B), 0, VOCAB, dtype=jnp.int32)
    gazetteers = jnp.zeros((T, B, GAZ), jnp.float32)
    lengths = [T] * B

    results, emissions = bilstm_crf_forward(fused, sentence_ids, gazetteers, lengths)
    em_np = np.asarray(emissions)

    # 1) emissions vs. full-f32 numpy reference (bf16 MXU operands -> loose tol)
    ref_results, ref_em = reference_forward(params, sentence_ids, gazetteers, lengths)
    np.testing.assert_allclose(em_np, np.asarray(ref_em, np.float32),
                               atol=5e-2, rtol=5e-2)

    # 2) the on-device Viterbi decode must exactly match a numpy Viterbi run on
    #    the kernel's OWN emissions (identical f32 inputs -> identical path);
    #    this validates the CRF/backtrace logic independent of bf16 LSTM noise.
    start_np = np.asarray(params["start_t"])[0]
    trans_np = np.asarray(params["trans"])
    end_np = np.asarray(params["end_t"])[0]
    for b, (score, path) in enumerate(results):
        r_score, r_path = viterbi_np(em_np[:lengths[b], b, :],
                                     start_np, trans_np, end_np)
        assert path == r_path, (path, r_path)
        assert abs(score - r_score) < 1e-3, (score, r_score)
        # loose end-to-end score sanity check vs. the full-f32 reference pipeline
        assert abs(score - ref_results[b][0]) < 0.5, (score, ref_results[b][0])

    print("KERNEL_OK")
</pallas_src>

<mosaic_0001>
module attributes {stable_mosaic.version = 11 : i64} {
  func.func @_bilstm_crf_kernel(%arg0: memref<16x32xbf16, #tpu.memory_space<vmem>>, %arg1: memref<32x256xbf16, #tpu.memory_space<vmem>>, %arg2: memref<1x256xf32, #tpu.memory_space<vmem>>, %arg3: memref<64x256xbf16, #tpu.memory_space<vmem>>, %arg4: memref<64x5xf32, #tpu.memory_space<vmem>>, %arg5: memref<1x5xf32, #tpu.memory_space<vmem>>, %arg6: memref<1x5xf32, #tpu.memory_space<vmem>>, %arg7: memref<5x5xf32, #tpu.memory_space<vmem>>, %arg8: memref<1x5xf32, #tpu.memory_space<vmem>>, %arg9: memref<16x5xf32, #tpu.memory_space<vmem>>, %arg10: memref<2x8xi32, #tpu.memory_space<vmem>>, %arg11: memref<2x1xf32, #tpu.memory_space<vmem>>, %arg12: memref<16x256xf32, #tpu.memory_space<vmem>>, %arg13: memref<16x64xf32, #tpu.memory_space<vmem>>, %arg14: memref<16x5xi32, #tpu.memory_space<vmem>>) attributes {dimension_semantics = [], scalar_prefetch = 0 : i64, scratch_operands = 3 : i64, tpu.core_type = #tpu.core_type<tc>} {
    %c0 = arith.constant 0 : index
    %c0_0 = arith.constant 0 : index
    %0 = vector.load %arg0[%c0, %c0_0] : memref<16x32xbf16, #tpu.memory_space<vmem>>, vector<16x32xbf16>
    %c0_1 = arith.constant 0 : index
    %c0_2 = arith.constant 0 : index
    %1 = vector.load %arg1[%c0_1, %c0_2] : memref<32x256xbf16, #tpu.memory_space<vmem>>, vector<32x256xbf16>
    %cst = arith.constant dense<0.000000e+00> : vector<16x256xf32>
    %2 = tpu.matmul %0, %1, %cst {dimension_numbers = #tpu.dot_dimension_numbers<[1], [0], [0], [1], [0, 0, 1, 1], [], []>} : vector<16x32xbf16>, vector<32x256xbf16>, vector<16x256xf32> -> vector<16x256xf32>
    %c0_3 = arith.constant 0 : index
    %c0_4 = arith.constant 0 : index
    %3 = vector.load %arg2[%c0_3, %c0_4] : memref<1x256xf32, #tpu.memory_space<vmem>>, vector<1x256xf32>
    %4 = vector.broadcast %3 : vector<1x256xf32> to vector<16x256xf32>
    %5 = arith.addf %2, %4 : vector<16x256xf32>
    %c0_5 = arith.constant 0 : index
    %c0_6 = arith.constant 0 : index
    %6 = vector.load %arg12[%c0_5, %c0_6] : memref<16x256xf32, #tpu.memory_space<vmem>>, vector<16x256xf32>
    tpu.vector_store %arg12[%c0_5, %c0_6], %5 {strides = array<i32>} : memref<16x256xf32, #tpu.memory_space<vmem>>, vector<16x256xf32>,
    %c0_7 = arith.constant 0 : index
    %c0_8 = arith.constant 0 : index
    %7 = vector.load %arg3[%c0_7, %c0_8] : memref<64x256xbf16, #tpu.memory_space<vmem>>, vector<64x256xbf16>
    %cst_9 = arith.constant 0.000000e+00 : f32
    %8 = vector.broadcast %cst_9 : f32 to vector<2x64xf32>
    %cst_10 = arith.constant 0.000000e+00 : f32
    %9 = vector.broadcast %cst_10 : f32 to vector<2x64xf32>
    %10 = arith.truncf %8 : vector<2x64xf32> to vector<2x64xbf16>
    %cst_11 = arith.constant dense<0.000000e+00> : vector<2x256xf32>
    %11 = tpu.matmul %10, %7, %cst_11 {dimension_numbers = #tpu.dot_dimension_numbers<[1], [0], [0], [1], [0, 0, 1, 1], [], []>} : vector<2x64xbf16>, vector<64x256xbf16>, vector<2x256xf32> -> vector<2x256xf32>
    %c0_12 = arith.constant 0 : index
    %c0_13 = arith.constant 0 : index
    %12 = vector.load %arg12[%c0_12, %c0_13] : memref<16x256xf32, #tpu.memory_space<vmem>>, vector<2x256xf32>
    %13 = arith.addf %11, %12 : vector<2x256xf32>
    %14 = vector.extract_strided_slice %13 {offsets = [0, 0], sizes = [2, 192], strides = [1, 1]} : vector<2x256xf32> to vector<2x192xf32>
    %15 = arith.negf %14 : vector<2x192xf32>
    %16 = math.exp %15 : vector<2x192xf32>
    %cst_14 = arith.constant 1.000000e+00 : f32
    %17 = vector.broadcast %cst_14 : f32 to vector<2x192xf32>
    %18 = arith.addf %17, %16 : vector<2x192xf32>
    %19 = arith.divf %17, %18 : vector<2x192xf32>
    %20 = vector.extract_strided_slice %13 {offsets = [0, 192], sizes = [2, 64], strides = [1, 1]} : vector<2x256xf32> to vector<2x64xf32>
    %21 = math.tanh %20 : vector<2x64xf32>
    %22 = vector.extract_strided_slice %19 {offsets = [0, 0], sizes = [2, 64], strides = [1, 1]} : vector<2x192xf32> to vector<2x64xf32>
    %23 = vector.extract_strided_slice %19 {offsets = [0, 64], sizes = [2, 64], strides = [1, 1]} : vector<2x192xf32> to vector<2x64xf32>
    %24 = vector.extract_strided_slice %19 {offsets = [0, 128], sizes = [2, 64], strides = [1, 1]} : vector<2x192xf32> to vector<2x64xf32>
    %25 = arith.mulf %23, %9 : vector<2x64xf32>
    %26 = arith.mulf %22, %21 : vector<2x64xf32>
    %27 = arith.addf %25, %26 : vector<2x64xf32>
    %28 = math.tanh %27 : vector<2x64xf32>
    %29 = arith.mulf %24, %28 : vector<2x64xf32>
    %30 = vector.extract_strided_slice %29 {offsets = [0, 0], sizes = [2, 32], strides = [1, 1]} : vector<2x64xf32> to vector<2x32xf32>
    %c0_15 = arith.constant 0 : index
    %c0_16 = arith.constant 0 : index
    %31 = vector.load %arg13[%c0_15, %c0_16] : memref<16x64xf32, #tpu.memory_space<vmem>>, vector<2x32xf32>
    tpu.vector_store %arg13[%c0_15, %c0_16], %30 {strides = array<i32>} : memref<16x64xf32, #tpu.memory_space<vmem>>, vector<2x32xf32>,
    %32 = vector.extract_strided_slice %29 {offsets = [0, 32], sizes = [2, 32], strides = [1, 1]} : vector<2x64xf32> to vector<2x32xf32>
    %c14 = arith.constant 14 : index
    %c32 = arith.constant 32 : index
    %33 = vector.load %arg13[%c14, %c32] : memref<16x64xf32, #tpu.memory_space<vmem>>, vector<2x32xf32>
    tpu.vector_store %arg13[%c14, %c32], %32 {strides = array<i32>} : memref<16x64xf32, #tpu.memory_space<vmem>>, vector<2x32xf32>,
    %34 = arith.truncf %29 : vector<2x64xf32> to vector<2x64xbf16>
    %cst_17 = arith.constant dense<0.000000e+00> : vector<2x256xf32>
    %35 = tpu.matmul %34, %7, %cst_17 {dimension_numbers = #tpu.dot_dimension_numbers<[1], [0], [0], [1], [0, 0, 1, 1], [], []>} : vector<2x64xbf16>, vector<64x256xbf16>, vector<2x256xf32> -> vector<2x256xf32>
    %c2 = arith.constant 2 : index
    %c0_18 = arith.constant 0 : index
    %36 = vector.load %arg12[%c2, %c0_18] : memref<16x256xf32, #tpu.memory_space<vmem>>, vector<2x256xf32>
    %37 = arith.addf %35, %36 : vector<2x256xf32>
    %38 = vector.extract_strided_slice %37 {offsets = [0, 0], sizes = [2, 192], strides = [1, 1]} : vector<2x256xf32> to vector<2x192xf32>
    %39 = arith.negf %38 : vector<2x192xf32>
    %40 = math.exp %39 : vector<2x192xf32>
    %cst_19 = arith.constant 1.000000e+00 : f32
    %41 = vector.broadcast %cst_19 : f32 to vector<2x192xf32>
    %42 = arith.addf %41, %40 : vector<2x192xf32>
    %43 = arith.divf %41, %42 : vector<2x192xf32>
    %44 = vector.extract_strided_slice %37 {offsets = [0, 192], sizes = [2, 64], strides = [1, 1]} : vector<2x256xf32> to vector<2x64xf32>
    %45 = math.tanh %44 : vector<2x64xf32>
    %46 = vector.extract_strided_slice %43 {offsets = [0, 0], sizes = [2, 64], strides = [1, 1]} : vector<2x192xf32> to vector<2x64xf32>
    %47 = vector.extract_strided_slice %43 {offsets = [0, 64], sizes = [2, 64], strides = [1, 1]} : vector<2x192xf32> to vector<2x64xf32>
    %48 = vector.extract_strided_slice %43 {offsets = [0, 128], sizes = [2, 64], strides = [1, 1]} : vector<2x192xf32> to vector<2x64xf32>
    %49 = arith.mulf %47, %27 : vector<2x64xf32>
    %50 = arith.mulf %46, %45 : vector<2x64xf32>
    %51 = arith.addf %49, %50 : vector<2x64xf32>
    %52 = math.tanh %51 : vector<2x64xf32>
    %53 = arith.mulf %48, %52 : vector<2x64xf32>
    %54 = vector.extract_strided_slice %53 {offsets = [0, 0], sizes = [2, 32], strides = [1, 1]} : vector<2x64xf32> to vector<2x32xf32>
    %c2_20 = arith.constant 2 : index
    %c0_21 = arith.constant 0 : index
    %55 = vector.load %arg13[%c2_20, %c0_21] : memref<16x64xf32, #tpu.memory_space<vmem>>, vector<2x32xf32>
    tpu.vector_store %arg13[%c2_20, %c0_21], %54 {strides = array<i32>} : memref<16x64xf32, #tpu.memory_space<vmem>>, vector<2x32xf32>,
    %56 = vector.extract_strided_slice %53 {offsets = [0, 32], sizes = [2, 32], strides = [1, 1]} : vector<2x64xf32> to vector<2x32xf32>
    %c12 = arith.constant 12 : index
    %c32_22 = arith.constant 32 : index
    %57 = vector.load %arg13[%c12, %c32_22] : memref<16x64xf32, #tpu.memory_space<vmem>>, vector<2x32xf32>
    tpu.vector_store %arg13[%c12, %c32_22], %56 {strides = array<i32>} : memref<16x64xf32, #tpu.memory_space<vmem>>, vector<2x32xf32>,
    %58 = arith.truncf %53 : vector<2x64xf32> to vector<2x64xbf16>
    %cst_23 = arith.constant dense<0.000000e+00> : vector<2x256xf32>
    %59 = tpu.matmul %58, %7, %cst_23 {dimension_numbers = #tpu.dot_dimension_numbers<[1], [0], [0], [1], [0, 0, 1, 1], [], []>} : vector<2x64xbf16>, vector<64x256xbf16>, vector<2x256xf32> -> vector<2x256xf32>
    %c4 = arith.constant 4 : index
    %c0_24 = arith.constant 0 : index
    %60 = vector.load %arg12[%c4, %c0_24] : memref<16x256xf32, #tpu.memory_space<vmem>>, vector<2x256xf32>
    %61 = arith.addf %59, %60 : vector<2x256xf32>
    %62 = vector.extract_strided_slice %61 {offsets = [0, 0], sizes = [2, 192], strides = [1, 1]} : vector<2x256xf32> to vector<2x192xf32>
    %63 = arith.negf %62 : vector<2x192xf32>
    %64 = math.exp %63 : vector<2x192xf32>
    %cst_25 = arith.constant 1.000000e+00 : f32
    %65 = vector.broadcast %cst_25 : f32 to vector<2x192xf32>
    %66 = arith.addf %65, %64 : vector<2x192xf32>
    %67 = arith.divf %65, %66 : vector<2x192xf32>
    %68 = vector.extract_strided_slice %61 {offsets = [0, 192], sizes = [2, 64], strides = [1, 1]} : vector<2x256xf32> to vector<2x64xf32>
    %69 = math.tanh %68 : vector<2x64xf32>
    %70 = vector.extract_strided_slice %67 {offsets = [0, 0], sizes = [2, 64], strides = [1, 1]} : vector<2x192xf32> to vector<2x64xf32>
    %71 = vector.extract_strided_slice %67 {offsets = [0, 64], sizes = [2, 64], strides = [1, 1]} : vector<2x192xf32> to vector<2x64xf32>
    %72 = vector.extract_strided_slice %67 {offsets = [0, 128], sizes = [2, 64], strides = [1, 1]} : vector<2x192xf32> to vector<2x64xf32>
    %73 = arith.mulf %71, %51 : vector<2x64xf32>
    %74 = arith.mulf %70, %69 : vector<2x64xf32>
    %75 = arith.addf %73, %74 : vector<2x64xf32>
    %76 = math.tanh %75 : vector<2x64xf32>
    %77 = arith.mulf %72, %76 : vector<2x64xf32>
    %78 = vector.extract_strided_slice %77 {offsets = [0, 0], sizes = [2, 32], strides = [1, 1]} : vector<2x64xf32> to vector<2x32xf32>
    %c4_26 = arith.constant 4 : index
    %c0_27 = arith.constant 0 : index
    %79 = vector.load %arg13[%c4_26, %c0_27] : memref<16x64xf32, #tpu.memory_space<vmem>>, vector<2x32xf32>
    tpu.vector_store %arg13[%c4_26, %c0_27], %78 {strides = array<i32>} : memref<16x64xf32, #tpu.memory_space<vmem>>, vector<2x32xf32>,
    %80 = vector.extract_strided_slice %77 {offsets = [0, 32], sizes = [2, 32], strides = [1, 1]} : vector<2x64xf32> to vector<2x32xf32>
    %c10 = arith.constant 10 : index
    %c32_28 = arith.constant 32 : index
    %81 = vector.load %arg13[%c10, %c32_28] : memref<16x64xf32, #tpu.memory_space<vmem>>, vector<2x32xf32>
    tpu.vector_store %arg13[%c10, %c32_28], %80 {strides = array<i32>} : memref<16x64xf32, #tpu.memory_space<vmem>>, vector<2x32xf32>,
    %82 = arith.truncf %77 : vector<2x64xf32> to vector<2x64xbf16>
    %cst_29 = arith.constant dense<0.000000e+00> : vector<2x256xf32>
    %83 = tpu.matmul %82, %7, %cst_29 {dimension_numbers = #tpu.dot_dimension_numbers<[1], [0], [0], [1], [0, 0, 1, 1], [], []>} : vector<2x64xbf16>, vector<64x256xbf16>, vector<2x256xf32> -> vector<2x256xf32>
    %c6 = arith.constant 6 : index
    %c0_30 = arith.constant 0 : index
    %84 = vector.load %arg12[%c6, %c0_30] : memref<16x256xf32, #tpu.memory_space<vmem>>, vector<2x256xf32>
    %85 = arith.addf %83, %84 : vector<2x256xf32>
    %86 = vector.extract_strided_slice %85 {offsets = [0, 0], sizes = [2, 192], strides = [1, 1]} : vector<2x256xf32> to vector<2x192xf32>
    %87 = arith.negf %86 : vector<2x192xf32>
    %88 = math.exp %87 : vector<2x192xf32>
    %cst_31 = arith.constant 1.000000e+00 : f32
    %89 = vector.broadcast %cst_31 : f32 to vector<2x192xf32>
    %90 = arith.addf %89, %88 : vector<2x192xf32>
    %91 = arith.divf %89, %90 : vector<2x192xf32>
    %92 = vector.extract_strided_slice %85 {offsets = [0, 192], sizes = [2, 64], strides = [1, 1]} : vector<2x256xf32> to vector<2x64xf32>
    %93 = math.tanh %92 : vector<2x64xf32>
    %94 = vector.extract_strided_slice %91 {offsets = [0, 0], sizes = [2, 64], strides = [1, 1]} : vector<2x192xf32> to vector<2x64xf32>
    %95 = vector.extract_strided_slice %91 {offsets = [0, 64], sizes = [2, 64], strides = [1, 1]} : vector<2x192xf32> to vector<2x64xf32>
    %96 = vector.extract_strided_slice %91 {offsets = [0, 128], sizes = [2, 64], strides = [1, 1]} : vector<2x192xf32> to vector<2x64xf32>
    %97 = arith.mulf %95, %75 : vector<2x64xf32>
    %98 = arith.mulf %94, %93 : vector<2x64xf32>
    %99 = arith.addf %97, %98 : vector<2x64xf32>
    %100 = math.tanh %99 : vector<2x64xf32>
    %101 = arith.mulf %96, %100 : vector<2x64xf32>
    %102 = vector.extract_strided_slice %101 {offsets = [0, 0], sizes = [2, 32], strides = [1, 1]} : vector<2x64xf32> to vector<2x32xf32>
    %c6_32 = arith.constant 6 : index
    %c0_33 = arith.constant 0 : index
    %103 = vector.load %arg13[%c6_32, %c0_33] : memref<16x64xf32, #tpu.memory_space<vmem>>, vector<2x32xf32>
    tpu.vector_store %arg13[%c6_32, %c0_33], %102 {strides = array<i32>} : memref<16x64xf32, #tpu.memory_space<vmem>>, vector<2x32xf32>,
    %104 = vector.extract_strided_slice %101 {offsets = [0, 32], sizes = [2, 32], strides = [1, 1]} : vector<2x64xf32> to vector<2x32xf32>
    %c8 = arith.constant 8 : index
    %c32_34 = arith.constant 32 : index
    %105 = vector.load %arg13[%c8, %c32_34] : memref<16x64xf32, #tpu.memory_space<vmem>>, vector<2x32xf32>
    tpu.vector_store %arg13[%c8, %c32_34], %104 {strides = array<i32>} : memref<16x64xf32, #tpu.memory_space<vmem>>, vector<2x32xf32>,
    %106 = arith.truncf %101 : vector<2x64xf32> to vector<2x64xbf16>
    %cst_35 = arith.constant dense<0.000000e+00> : vector<2x256xf32>
    %107 = tpu.matmul %106, %7, %cst_35 {dimension_numbers = #tpu.dot_dimension_numbers<[1], [0], [0], [1], [0, 0, 1, 1], [], []>} : vector<2x64xbf16>, vector<64x256xbf16>, vector<2x256xf32> -> vector<2x256xf32>
    %c8_36 = arith.constant 8 : index
    %c0_37 = arith.constant 0 : index
    %108 = vector.load %arg12[%c8_36, %c0_37] : memref<16x256xf32, #tpu.memory_space<vmem>>, vector<2x256xf32>
    %109 = arith.addf %107, %108 : vector<2x256xf32>
    %110 = vector.extract_strided_slice %109 {offsets = [0, 0], sizes = [2, 192], strides = [1, 1]} : vector<2x256xf32> to vector<2x192xf32>
    %111 = arith.negf %110 : vector<2x192xf32>
    %112 = math.exp %111 : vector<2x192xf32>
    %cst_38 = arith.constant 1.000000e+00 : f32
    %113 = vector.broadcast %cst_38 : f32 to vector<2x192xf32>
    %114 = arith.addf %113, %112 : vector<2x192xf32>
    %115 = arith.divf %113, %114 : vector<2x192xf32>
    %116 = vector.extract_strided_slice %109 {offsets = [0, 192], sizes = [2, 64], strides = [1, 1]} : vector<2x256xf32> to vector<2x64xf32>
    %117 = math.tanh %116 : vector<2x64xf32>
    %118 = vector.extract_strided_slice %115 {offsets = [0, 0], sizes = [2, 64], strides = [1, 1]} : vector<2x192xf32> to vector<2x64xf32>
    %119 = vector.extract_strided_slice %115 {offsets = [0, 64], sizes = [2, 64], strides = [1, 1]} : vector<2x192xf32> to vector<2x64xf32>
    %120 = vector.extract_strided_slice %115 {offsets = [0, 128], sizes = [2, 64], strides = [1, 1]} : vector<2x192xf32> to vector<2x64xf32>
    %121 = arith.mulf %119, %99 : vector<2x64xf32>
    %122 = arith.mulf %118, %117 : vector<2x64xf32>
    %123 = arith.addf %121, %122 : vector<2x64xf32>
    %124 = math.tanh %123 : vector<2x64xf32>
    %125 = arith.mulf %120, %124 : vector<2x64xf32>
    %126 = vector.extract_strided_slice %125 {offsets = [0, 0], sizes = [2, 32], strides = [1, 1]} : vector<2x64xf32> to vector<2x32xf32>
    %c8_39 = arith.constant 8 : index
    %c0_40 = arith.constant 0 : index
    %127 = vector.load %arg13[%c8_39, %c0_40] : memref<16x64xf32, #tpu.memory_space<vmem>>, vector<2x32xf32>
    tpu.vector_store %arg13[%c8_39, %c0_40], %126 {strides = array<i32>} : memref<16x64xf32, #tpu.memory_space<vmem>>, vector<2x32xf32>,
    %128 = vector.extract_strided_slice %125 {offsets = [0, 32], sizes = [2, 32], strides = [1, 1]} : vector<2x64xf32> to vector<2x32xf32>
    %c6_41 = arith.constant 6 : index
    %c32_42 = arith.constant 32 : index
    %129 = vector.load %arg13[%c6_41, %c32_42] : memref<16x64xf32, #tpu.memory_space<vmem>>, vector<2x32xf32>
    tpu.vector_store %arg13[%c6_41, %c32_42], %128 {strides = array<i32>} : memref<16x64xf32, #tpu.memory_space<vmem>>, vector<2x32xf32>,
    %130 = arith.truncf %125 : vector<2x64xf32> to vector<2x64xbf16>
    %cst_43 = arith.constant dense<0.000000e+00> : vector<2x256xf32>
    %131 = tpu.matmul %130, %7, %cst_43 {dimension_numbers = #tpu.dot_dimension_numbers<[1], [0], [0], [1], [0, 0, 1, 1], [], []>} : vector<2x64xbf16>, vector<64x256xbf16>, vector<2x256xf32> -> vector<2x256xf32>
    %c10_44 = arith.constant 10 : index
    %c0_45 = arith.constant 0 : index
    %132 = vector.load %arg12[%c10_44, %c0_45] : memref<16x256xf32, #tpu.memory_space<vmem>>, vector<2x256xf32>
    %133 = arith.addf %131, %132 : vector<2x256xf32>
    %134 = vector.extract_strided_slice %133 {offsets = [0, 0], sizes = [2, 192], strides = [1, 1]} : vector<2x256xf32> to vector<2x192xf32>
    %135 = arith.negf %134 : vector<2x192xf32>
    %136 = math.exp %135 : vector<2x192xf32>
    %cst_46 = arith.constant 1.000000e+00 : f32
    %137 = vector.broadcast %cst_46 : f32 to vector<2x192xf32>
    %138 = arith.addf %137, %136 : vector<2x192xf32>
    %139 = arith.divf %137, %138 : vector<2x192xf32>
    %140 = vector.extract_strided_slice %133 {offsets = [0, 192], sizes = [2, 64], strides = [1, 1]} : vector<2x256xf32> to vector<2x64xf32>
    %141 = math.tanh %140 : vector<2x64xf32>
    %142 = vector.extract_strided_slice %139 {offsets = [0, 0], sizes = [2, 64], strides = [1, 1]} : vector<2x192xf32> to vector<2x64xf32>
    %143 = vector.extract_strided_slice %139 {offsets = [0, 64], sizes = [2, 64], strides = [1, 1]} : vector<2x192xf32> to vector<2x64xf32>
    %144 = vector.extract_strided_slice %139 {offsets = [0, 128], sizes = [2, 64], strides = [1, 1]} : vector<2x192xf32> to vector<2x64xf32>
    %145 = arith.mulf %143, %123 : vector<2x64xf32>
    %146 = arith.mulf %142, %141 : vector<2x64xf32>
    %147 = arith.addf %145, %146 : vector<2x64xf32>
    %148 = math.tanh %147 : vector<2x64xf32>
    %149 = arith.mulf %144, %148 : vector<2x64xf32>
    %150 = vector.extract_strided_slice %149 {offsets = [0, 0], sizes = [2, 32], strides = [1, 1]} : vector<2x64xf32> to vector<2x32xf32>
    %c10_47 = arith.constant 10 : index
    %c0_48 = arith.constant 0 : index
    %151 = vector.load %arg13[%c10_47, %c0_48] : memref<16x64xf32, #tpu.memory_space<vmem>>, vector<2x32xf32>
    tpu.vector_store %arg13[%c10_47, %c0_48], %150 {strides = array<i32>} : memref<16x64xf32, #tpu.memory_space<vmem>>, vector<2x32xf32>,
    %152 = vector.extract_strided_slice %149 {offsets = [0, 32], sizes = [2, 32], strides = [1, 1]} : vector<2x64xf32> to vector<2x32xf32>
    %c4_49 = arith.constant 4 : index
    %c32_50 = arith.constant 32 : index
    %153 = vector.load %arg13[%c4_49, %c32_50] : memref<16x64xf32, #tpu.memory_space<vmem>>, vector<2x32xf32>
    tpu.vector_store %arg13[%c4_49, %c32_50], %152 {strides = array<i32>} : memref<16x64xf32, #tpu.memory_space<vmem>>, vector<2x32xf32>,
    %154 = arith.truncf %149 : vector<2x64xf32> to vector<2x64xbf16>
    %cst_51 = arith.constant dense<0.000000e+00> : vector<2x256xf32>
    %155 = tpu.matmul %154, %7, %cst_51 {dimension_numbers = #tpu.dot_dimension_numbers<[1], [0], [0], [1], [0, 0, 1, 1], [], []>} : vector<2x64xbf16>, vector<64x256xbf16>, vector<2x256xf32> -> vector<2x256xf32>
    %c12_52 = arith.constant 12 : index
    %c0_53 = arith.constant 0 : index
    %156 = vector.load %arg12[%c12_52, %c0_53] : memref<16x256xf32, #tpu.memory_space<vmem>>, vector<2x256xf32>
    %157 = arith.addf %155, %156 : vector<2x256xf32>
    %158 = vector.extract_strided_slice %157 {offsets = [0, 0], sizes = [2, 192], strides = [1, 1]} : vector<2x256xf32> to vector<2x192xf32>
    %159 = arith.negf %158 : vector<2x192xf32>
    %160 = math.exp %159 : vector<2x192xf32>
    %cst_54 = arith.constant 1.000000e+00 : f32
    %161 = vector.broadcast %cst_54 : f32 to vector<2x192xf32>
    %162 = arith.addf %161, %160 : vector<2x192xf32>
    %163 = arith.divf %161, %162 : vector<2x192xf32>
    %164 = vector.extract_strided_slice %157 {offsets = [0, 192], sizes = [2, 64], strides = [1, 1]} : vector<2x256xf32> to vector<2x64xf32>
    %165 = math.tanh %164 : vector<2x64xf32>
    %166 = vector.extract_strided_slice %163 {offsets = [0, 0], sizes = [2, 64], strides = [1, 1]} : vector<2x192xf32> to vector<2x64xf32>
    %167 = vector.extract_strided_slice %163 {offsets = [0, 64], sizes = [2, 64], strides = [1, 1]} : vector<2x192xf32> to vector<2x64xf32>
    %168 = vector.extract_strided_slice %163 {offsets = [0, 128], sizes = [2, 64], strides = [1, 1]} : vector<2x192xf32> to vector<2x64xf32>
    %169 = arith.mulf %167, %147 : vector<2x64xf32>
    %170 = arith.mulf %166, %165 : vector<2x64xf32>
    %171 = arith.addf %169, %170 : vector<2x64xf32>
    %172 = math.tanh %171 : vector<2x64xf32>
    %173 = arith.mulf %168, %172 : vector<2x64xf32>
    %174 = vector.extract_strided_slice %173 {offsets = [0, 0], sizes = [2, 32], strides = [1, 1]} : vector<2x64xf32> to vector<2x32xf32>
    %c12_55 = arith.constant 12 : index
    %c0_56 = arith.constant 0 : index
    %175 = vector.load %arg13[%c12_55, %c0_56] : memref<16x64xf32, #tpu.memory_space<vmem>>, vector<2x32xf32>
    tpu.vector_store %arg13[%c12_55, %c0_56], %174 {strides = array<i32>} : memref<16x64xf32, #tpu.memory_space<vmem>>, vector<2x32xf32>,
    %176 = vector.extract_strided_slice %173 {offsets = [0, 32], sizes = [2, 32], strides = [1, 1]} : vector<2x64xf32> to vector<2x32xf32>
    %c2_57 = arith.constant 2 : index
    %c32_58 = arith.constant 32 : index
    %177 = vector.load %arg13[%c2_57, %c32_58] : memref<16x64xf32, #tpu.memory_space<vmem>>, vector<2x32xf32>
    tpu.vector_store %arg13[%c2_57, %c32_58], %176 {strides = array<i32>} : memref<16x64xf32, #tpu.memory_space<vmem>>, vector<2x32xf32>,
    %178 = arith.truncf %173 : vector<2x64xf32> to vector<2x64xbf16>
    %cst_59 = arith.constant dense<0.000000e+00> : vector<2x256xf32>
    %179 = tpu.matmul %178, %7, %cst_59 {dimension_numbers = #tpu.dot_dimension_numbers<[1], [0], [0], [1], [0, 0, 1, 1], [], []>} : vector<2x64xbf16>, vector<64x256xbf16>, vector<2x256xf32> -> vector<2x256xf32>
    %c14_60 = arith.constant 14 : index
    %c0_61 = arith.constant 0 : index
    %180 = vector.load %arg12[%c14_60, %c0_61] : memref<16x256xf32, #tpu.memory_space<vmem>>, vector<2x256xf32>
    %181 = arith.addf %179, %180 : vector<2x256xf32>
    %182 = vector.extract_strided_slice %181 {offsets = [0, 0], sizes = [2, 192], strides = [1, 1]} : vector<2x256xf32> to vector<2x192xf32>
    %183 = arith.negf %182 : vector<2x192xf32>
    %184 = math.exp %183 : vector<2x192xf32>
    %cst_62 = arith.constant 1.000000e+00 : f32
    %185 = vector.broadcast %cst_62 : f32 to vector<2x192xf32>
    %186 = arith.addf %185, %184 : vector<2x192xf32>
    %187 = arith.divf %185, %186 : vector<2x192xf32>
    %188 = vector.extract_strided_slice %181 {offsets = [0, 192], sizes = [2, 64], strides = [1, 1]} : vector<2x256xf32> to vector<2x64xf32>
    %189 = math.tanh %188 : vector<2x64xf32>
    %190 = vector.extract_strided_slice %187 {offsets = [0, 0], sizes = [2, 64], strides = [1, 1]} : vector<2x192xf32> to vector<2x64xf32>
    %191 = vector.extract_strided_slice %187 {offsets = [0, 64], sizes = [2, 64], strides = [1, 1]} : vector<2x192xf32> to vector<2x64xf32>
    %192 = vector.extract_strided_slice %187 {offsets = [0, 128], sizes = [2, 64], strides = [1, 1]} : vector<2x192xf32> to vector<2x64xf32>
    %193 = arith.mulf %191, %171 : vector<2x64xf32>
    %194 = arith.mulf %190, %189 : vector<2x64xf32>
    %195 = arith.addf %193, %194 : vector<2x64xf32>
    %196 = math.tanh %195 : vector<2x64xf32>
    %197 = arith.mulf %192, %196 : vector<2x64xf32>
    %198 = vector.extract_strided_slice %197 {offsets = [0, 0], sizes = [2, 32], strides = [1, 1]} : vector<2x64xf32> to vector<2x32xf32>
    %c14_63 = arith.constant 14 : index
    %c0_64 = arith.constant 0 : index
    %199 = vector.load %arg13[%c14_63, %c0_64] : memref<16x64xf32, #tpu.memory_space<vmem>>, vector<2x32xf32>
    tpu.vector_store %arg13[%c14_63, %c0_64], %198 {strides = array<i32>} : memref<16x64xf32, #tpu.memory_space<vmem>>, vector<2x32xf32>,
    %200 = vector.extract_strided_slice %197 {offsets = [0, 32], sizes = [2, 32], strides = [1, 1]} : vector<2x64xf32> to vector<2x32xf32>
    %c0_65 = arith.constant 0 : index
    %c32_66 = arith.constant 32 : index
    %201 = vector.load %arg13[%c0_65, %c32_66] : memref<16x64xf32, #tpu.memory_space<vmem>>, vector<2x32xf32>
    tpu.vector_store %arg13[%c0_65, %c32_66], %200 {strides = array<i32>} : memref<16x64xf32, #tpu.memory_space<vmem>>, vector<2x32xf32>,
    %c0_67 = arith.constant 0 : index
    %c0_68 = arith.constant 0 : index
    %202 = vector.load %arg13[%c0_67, %c0_68] : memref<16x64xf32, #tpu.memory_space<vmem>>, vector<16x64xf32>
    %c0_69 = arith.constant 0 : index
    %c0_70 = arith.constant 0 : index
    %203 = vector.load %arg4[%c0_69, %c0_70] : memref<64x5xf32, #tpu.memory_space<vmem>>, vector<64x5xf32>
    %cst_71 = arith.constant dense<0.000000e+00> : vector<16x5xf32>
    %204 = tpu.matmul %202, %203, %cst_71 {dimension_numbers = #tpu.dot_dimension_numbers<[1], [0], [0], [1], [0, 0, 1, 1], [], []>} : vector<16x64xf32>, vector<64x5xf32>, vector<16x5xf32> -> vector<16x5xf32>
    %c0_72 = arith.constant 0 : index
    %c0_73 = arith.constant 0 : index
    %205 = vector.load %arg5[%c0_72, %c0_73] : memref<1x5xf32, #tpu.memory_space<vmem>>, vector<1x5xf32>
    %206 = vector.broadcast %205 : vector<1x5xf32> to vector<16x5xf32>
    %207 = arith.addf %204, %206 : vector<16x5xf32>
    %c0_74 = arith.constant 0 : index
    %c0_75 = arith.constant 0 : index
    %208 = vector.load %arg9[%c0_74, %c0_75] : memref<16x5xf32, #tpu.memory_space<vmem>>, vector<16x5xf32>
    tpu.vector_store %arg9[%c0_74, %c0_75], %207 {strides = array<i32>} : memref<16x5xf32, #tpu.memory_space<vmem>>, vector<16x5xf32>,
    %c0_76 = arith.constant 0 : index
    %c0_77 = arith.constant 0 : index
    %209 = vector.load %arg7[%c0_76, %c0_77] : memref<5x5xf32, #tpu.memory_space<vmem>>, vector<5x5xf32>
    %210 = tpu.iota {dimensions = array<i32: 2>} : vector<2x5x5xi32>
    %c0_78 = arith.constant 0 : index
    %c0_79 = arith.constant 0 : index
    %211 = vector.load %arg6[%c0_78, %c0_79] : memref<1x5xf32, #tpu.memory_space<vmem>>, vector<1x5xf32>
    %212 = vector.extract_strided_slice %207 {offsets = [0, 0], sizes = [2, 5], strides = [1, 1]} : vector<16x5xf32> to vector<2x5xf32>
    %213 = vector.broadcast %211 : vector<1x5xf32> to vector<2x5xf32>
    %214 = arith.addf %213, %212 : vector<2x5xf32>
    %215 = vector.shape_cast %214 : vector<2x5xf32> to vector<2x1x5xf32>
    %216 = vector.shape_cast %209 : vector<5x5xf32> to vector<1x5x5xf32>
    %217 = vector.broadcast %215 : vector<2x1x5xf32> to vector<2x5x5xf32>
    %218 = vector.broadcast %216 : vector<1x5x5xf32> to vector<2x5x5xf32>
    %219 = arith.addf %217, %218 : vector<2x5x5xf32>
    %cst_80 = arith.constant dense<0xFF800000> : vector<2x5xf32>
    %220 = vector.multi_reduction <maximumf>, %219, %cst_80 [2] : vector<2x5x5xf32> to vector<2x5xf32>
    %221 = vector.shape_cast %220 : vector<2x5xf32> to vector<2x5x1xf32>
    %222 = vector.broadcast %221 : vector<2x5x1xf32> to vector<2x5x5xf32>
    %223 = arith.cmpf oge, %219, %222 : vector<2x5x5xf32>
    %c5_i32 = arith.constant 5 : i32
    %224 = vector.broadcast %c5_i32 : i32 to vector<2x5x5xi32>
    %225 = arith.select %223, %210, %224 : vector<2x5x5xi1>, vector<2x5x5xi32>
    %cst_81 = arith.constant dense<2147483647> : vector<2x5xi32>
    %226 = vector.multi_reduction <minsi>, %225, %cst_81 [2] : vector<2x5x5xi32> to vector<2x5xi32>
    %c2_82 = arith.constant 2 : index
    %c0_83 = arith.constant 0 : index
    %227 = vector.load %arg14[%c2_82, %c0_83] : memref<16x5xi32, #tpu.memory_space<vmem>>, vector<2x5xi32>
    tpu.vector_store %arg14[%c2_82, %c0_83], %226 {strides = array<i32>} : memref<16x5xi32, #tpu.memory_space<vmem>>, vector<2x5xi32>,
    %228 = vector.extract_strided_slice %207 {offsets = [2, 0], sizes = [2, 5], strides = [1, 1]} : vector<16x5xf32> to vector<2x5xf32>
    %229 = arith.addf %228, %220 : vector<2x5xf32>
    %230 = vector.shape_cast %229 : vector<2x5xf32> to vector<2x1x5xf32>
    %231 = vector.shape_cast %209 : vector<5x5xf32> to vector<1x5x5xf32>
    %232 = vector.broadcast %230 : vector<2x1x5xf32> to vector<2x5x5xf32>
    %233 = vector.broadcast %231 : vector<1x5x5xf32> to vector<2x5x5xf32>
    %234 = arith.addf %232, %233 : vector<2x5x5xf32>
    %cst_84 = arith.constant dense<0xFF800000> : vector<2x5xf32>
    %235 = vector.multi_reduction <maximumf>, %234, %cst_84 [2] : vector<2x5x5xf32> to vector<2x5xf32>
    %236 = vector.shape_cast %235 : vector<2x5xf32> to vector<2x5x1xf32>
    %237 = vector.broadcast %236 : vector<2x5x1xf32> to vector<2x5x5xf32>
    %238 = arith.cmpf oge, %234, %237 : vector<2x5x5xf32>
    %c5_i32_85 = arith.constant 5 : i32
    %239 = vector.broadcast %c5_i32_85 : i32 to vector<2x5x5xi32>
    %240 = arith.select %238, %210, %239 : vector<2x5x5xi1>, vector<2x5x5xi32>
    %cst_86 = arith.constant dense<2147483647> : vector<2x5xi32>
    %241 = vector.multi_reduction <minsi>, %240, %cst_86 [2] : vector<2x5x5xi32> to vector<2x5xi32>
    %c4_87 = arith.constant 4 : index
    %c0_88 = arith.constant 0 : index
    %242 = vector.load %arg14[%c4_87, %c0_88] : memref<16x5xi32, #tpu.memory_space<vmem>>, vector<2x5xi32>
    tpu.vector_store %arg14[%c4_87, %c0_88], %241 {strides = array<i32>} : memref<16x5xi32, #tpu.memory_space<vmem>>, vector<2x5xi32>,
    %243 = vector.extract_strided_slice %207 {offsets = [4, 0], sizes = [2, 5], strides = [1, 1]} : vector<16x5xf32> to vector<2x5xf32>
    %244 = arith.addf %243, %235 : vector<2x5xf32>
    %245 = vector.shape_cast %244 : vector<2x5xf32> to vector<2x1x5xf32>
    %246 = vector.shape_cast %209 : vector<5x5xf32> to vector<1x5x5xf32>
    %247 = vector.broadcast %245 : vector<2x1x5xf32> to vector<2x5x5xf32>
    %248 = vector.broadcast %246 : vector<1x5x5xf32> to vector<2x5x5xf32>
    %249 = arith.addf %247, %248 : vector<2x5x5xf32>
    %cst_89 = arith.constant dense<0xFF800000> : vector<2x5xf32>
    %250 = vector.multi_reduction <maximumf>, %249, %cst_89 [2] : vector<2x5x5xf32> to vector<2x5xf32>
    %251 = vector.shape_cast %250 : vector<2x5xf32> to vector<2x5x1xf32>
    %252 = vector.broadcast %251 : vector<2x5x1xf32> to vector<2x5x5xf32>
    %253 = arith.cmpf oge, %249, %252 : vector<2x5x5xf32>
    %c5_i32_90 = arith.constant 5 : i32
    %254 = vector.broadcast %c5_i32_90 : i32 to vector<2x5x5xi32>
    %255 = arith.select %253, %210, %254 : vector<2x5x5xi1>, vector<2x5x5xi32>
    %cst_91 = arith.constant dense<2147483647> : vector<2x5xi32>
    %256 = vector.multi_reduction <minsi>, %255, %cst_91 [2] : vector<2x5x5xi32> to vector<2x5xi32>
    %c6_92 = arith.constant 6 : index
    %c0_93 = arith.constant 0 : index
    %257 = vector.load %arg14[%c6_92, %c0_93] : memref<16x5xi32, #tpu.memory_space<vmem>>, vector<2x5xi32>
    tpu.vector_store %arg14[%c6_92, %c0_93], %256 {strides = array<i32>} : memref<16x5xi32, #tpu.memory_space<vmem>>, vector<2x5xi32>,
    %258 = vector.extract_strided_slice %207 {offsets = [6, 0], sizes = [2, 5], strides = [1, 1]} : vector<16x5xf32> to vector<2x5xf32>
    %259 = arith.addf %258, %250 : vector<2x5xf32>
    %260 = vector.shape_cast %259 : vector<2x5xf32> to vector<2x1x5xf32>
    %261 = vector.shape_cast %209 : vector<5x5xf32> to vector<1x5x5xf32>
    %262 = vector.broadcast %260 : vector<2x1x5xf32> to vector<2x5x5xf32>
    %263 = vector.broadcast %261 : vector<1x5x5xf32> to vector<2x5x5xf32>
    %264 = arith.addf %262, %263 : vector<2x5x5xf32>
    %cst_94 = arith.constant dense<0xFF800000> : vector<2x5xf32>
    %265 = vector.multi_reduction <maximumf>, %264, %cst_94 [2] : vector<2x5x5xf32> to vector<2x5xf32>
    %266 = vector.shape_cast %265 : vector<2x5xf32> to vector<2x5x1xf32>
    %267 = vector.broadcast %266 : vector<2x5x1xf32> to vector<2x5x5xf32>
    %268 = arith.cmpf oge, %264, %267 : vector<2x5x5xf32>
    %c5_i32_95 = arith.constant 5 : i32
    %269 = vector.broadcast %c5_i32_95 : i32 to vector<2x5x5xi32>
    %270 = arith.select %268, %210, %269 : vector<2x5x5xi1>, vector<2x5x5xi32>
    %cst_96 = arith.constant dense<2147483647> : vector<2x5xi32>
    %271 = vector.multi_reduction <minsi>, %270, %cst_96 [2] : vector<2x5x5xi32> to vector<2x5xi32>
    %c8_97 = arith.constant 8 : index
    %c0_98 = arith.constant 0 : index
    %272 = vector.load %arg14[%c8_97, %c0_98] : memref<16x5xi32, #tpu.memory_space<vmem>>, vector<2x5xi32>
    tpu.vector_store %arg14[%c8_97, %c0_98], %271 {strides = array<i32>} : memref<16x5xi32, #tpu.memory_space<vmem>>, vector<2x5xi32>,
    %273 = vector.extract_strided_slice %207 {offsets = [8, 0], sizes = [2, 5], strides = [1, 1]} : vector<16x5xf32> to vector<2x5xf32>
    %274 = arith.addf %273, %265 : vector<2x5xf32>
    %275 = vector.shape_cast %274 : vector<2x5xf32> to vector<2x1x5xf32>
    %276 = vector.shape_cast %209 : vector<5x5xf32> to vector<1x5x5xf32>
    %277 = vector.broadcast %275 : vector<2x1x5xf32> to vector<2x5x5xf32>
    %278 = vector.broadcast %276 : vector<1x5x5xf32> to vector<2x5x5xf32>
    %279 = arith.addf %277, %278 : vector<2x5x5xf32>
    %cst_99 = arith.constant dense<0xFF800000> : vector<2x5xf32>
    %280 = vector.multi_reduction <maximumf>, %279, %cst_99 [2] : vector<2x5x5xf32> to vector<2x5xf32>
    %281 = vector.shape_cast %280 : vector<2x5xf32> to vector<2x5x1xf32>
    %282 = vector.broadcast %281 : vector<2x5x1xf32> to vector<2x5x5xf32>
    %283 = arith.cmpf oge, %279, %282 : vector<2x5x5xf32>
    %c5_i32_100 = arith.constant 5 : i32
    %284 = vector.broadcast %c5_i32_100 : i32 to vector<2x5x5xi32>
    %285 = arith.select %283, %210, %284 : vector<2x5x5xi1>, vector<2x5x5xi32>
    %cst_101 = arith.constant dense<2147483647> : vector<2x5xi32>
    %286 = vector.multi_reduction <minsi>, %285, %cst_101 [2] : vector<2x5x5xi32> to vector<2x5xi32>
    %c10_102 = arith.constant 10 : index
    %c0_103 = arith.constant 0 : index
    %287 = vector.load %arg14[%c10_102, %c0_103] : memref<16x5xi32, #tpu.memory_space<vmem>>, vector<2x5xi32>
    tpu.vector_store %arg14[%c10_102, %c0_103], %286 {strides = array<i32>} : memref<16x5xi32, #tpu.memory_space<vmem>>, vector<2x5xi32>,
    %288 = vector.extract_strided_slice %207 {offsets = [10, 0], sizes = [2, 5], strides = [1, 1]} : vector<16x5xf32> to vector<2x5xf32>
    %289 = arith.addf %288, %280 : vector<2x5xf32>
    %290 = vector.shape_cast %289 : vector<2x5xf32> to vector<2x1x5xf32>
    %291 = vector.shape_cast %209 : vector<5x5xf32> to vector<1x5x5xf32>
    %292 = vector.broadcast %290 : vector<2x1x5xf32> to vector<2x5x5xf32>
    %293 = vector.broadcast %291 : vector<1x5x5xf32> to vector<2x5x5xf32>
    %294 = arith.addf %292, %293 : vector<2x5x5xf32>
    %cst_104 = arith.constant dense<0xFF800000> : vector<2x5xf32>
    %295 = vector.multi_reduction <maximumf>, %294, %cst_104 [2] : vector<2x5x5xf32> to vector<2x5xf32>
    %296 = vector.shape_cast %295 : vector<2x5xf32> to vector<2x5x1xf32>
    %297 = vector.broadcast %296 : vector<2x5x1xf32> to vector<2x5x5xf32>
    %298 = arith.cmpf oge, %294, %297 : vector<2x5x5xf32>
    %c5_i32_105 = arith.constant 5 : i32
    %299 = vector.broadcast %c5_i32_105 : i32 to vector<2x5x5xi32>
    %300 = arith.select %298, %210, %299 : vector<2x5x5xi1>, vector<2x5x5xi32>
    %cst_106 = arith.constant dense<2147483647> : vector<2x5xi32>
    %301 = vector.multi_reduction <minsi>, %300, %cst_106 [2] : vector<2x5x5xi32> to vector<2x5xi32>
    %c12_107 = arith.constant 12 : index
    %c0_108 = arith.constant 0 : index
    %302 = vector.load %arg14[%c12_107, %c0_108] : memref<16x5xi32, #tpu.memory_space<vmem>>, vector<2x5xi32>
    tpu.vector_store %arg14[%c12_107, %c0_108], %301 {strides = array<i32>} : memref<16x5xi32, #tpu.memory_space<vmem>>, vector<2x5xi32>,
    %303 = vector.extract_strided_slice %207 {offsets = [12, 0], sizes = [2, 5], strides = [1, 1]} : vector<16x5xf32> to vector<2x5xf32>
    %304 = arith.addf %303, %295 : vector<2x5xf32>
    %305 = vector.shape_cast %304 : vector<2x5xf32> to vector<2x1x5xf32>
    %306 = vector.shape_cast %209 : vector<5x5xf32> to vector<1x5x5xf32>
    %307 = vector.broadcast %305 : vector<2x1x5xf32> to vector<2x5x5xf32>
    %308 = vector.broadcast %306 : vector<1x5x5xf32> to vector<2x5x5xf32>
    %309 = arith.addf %307, %308 : vector<2x5x5xf32>
    %cst_109 = arith.constant dense<0xFF800000> : vector<2x5xf32>
    %310 = vector.multi_reduction <maximumf>, %309, %cst_109 [2] : vector<2x5x5xf32> to vector<2x5xf32>
    %311 = vector.shape_cast %310 : vector<2x5xf32> to vector<2x5x1xf32>
    %312 = vector.broadcast %311 : vector<2x5x1xf32> to vector<2x5x5xf32>
    %313 = arith.cmpf oge, %309, %312 : vector<2x5x5xf32>
    %c5_i32_110 = arith.constant 5 : i32
    %314 = vector.broadcast %c5_i32_110 : i32 to vector<2x5x5xi32>
    %315 = arith.select %313, %210, %314 : vector<2x5x5xi1>, vector<2x5x5xi32>
    %cst_111 = arith.constant dense<2147483647> : vector<2x5xi32>
    %316 = vector.multi_reduction <minsi>, %315, %cst_111 [2] : vector<2x5x5xi32> to vector<2x5xi32>
    %c14_112 = arith.constant 14 : index
    %c0_113 = arith.constant 0 : index
    %317 = vector.load %arg14[%c14_112, %c0_113] : memref<16x5xi32, #tpu.memory_space<vmem>>, vector<2x5xi32>
    tpu.vector_store %arg14[%c14_112, %c0_113], %316 {strides = array<i32>} : memref<16x5xi32, #tpu.memory_space<vmem>>, vector<2x5xi32>,
    %318 = vector.extract_strided_slice %207 {offsets = [14, 0], sizes = [2, 5], strides = [1, 1]} : vector<16x5xf32> to vector<2x5xf32>
    %319 = arith.addf %318, %310 : vector<2x5xf32>
    %c0_114 = arith.constant 0 : index
    %c0_115 = arith.constant 0 : index
    %320 = vector.load %arg8[%c0_114, %c0_115] : memref<1x5xf32, #tpu.memory_space<vmem>>, vector<1x5xf32>
    %321 = vector.broadcast %320 : vector<1x5xf32> to vector<2x5xf32>
    %322 = arith.addf %319, %321 : vector<2x5xf32>
    %323 = tpu.iota {dimensions = array<i32: 1>} : vector<2x5xi32>
    %324 = tpu.iota {dimensions = array<i32: 1>} : vector<2x8xi32>
    %cst_116 = arith.constant dense<0xFF800000> : vector<2xf32>
    %325 = vector.multi_reduction <maximumf>, %322, %cst_116 [1] : vector<2x5xf32> to vector<2xf32>
    %326 = vector.shape_cast %325 : vector<2xf32> to vector<2x1xf32>
    %c0_117 = arith.constant 0 : index
    %c0_118 = arith.constant 0 : index
    %327 = vector.load %arg11[%c0_117, %c0_118] : memref<2x1xf32, #tpu.memory_space<vmem>>, vector<2x1xf32>
    tpu.vector_store %arg11[%c0_117, %c0_118], %326 {strides = array<i32>} : memref<2x1xf32, #tpu.memory_space<vmem>>, vector<2x1xf32>,
    %328 = vector.broadcast %326 : vector<2x1xf32> to vector<2x5xf32>
    %329 = arith.cmpf oge, %322, %328 : vector<2x5xf32>
    %c5_i32_119 = arith.constant 5 : i32
    %330 = vector.broadcast %c5_i32_119 : i32 to vector<2x5xi32>
    %331 = arith.select %329, %323, %330 : vector<2x5xi1>, vector<2x5xi32>
    %cst_120 = arith.constant dense<2147483647> : vector<2xi32>
    %332 = vector.multi_reduction <minsi>, %331, %cst_120 [1] : vector<2x5xi32> to vector<2xi32>
    %333 = vector.shape_cast %332 : vector<2xi32> to vector<2x1xi32>
    %c0_i32 = arith.constant 0 : i32
    %334 = vector.broadcast %c0_i32 : i32 to vector<2x8xi32>
    %c7_i32 = arith.constant 7 : i32
    %335 = vector.broadcast %c7_i32 : i32 to vector<2x8xi32>
    %336 = arith.cmpi eq, %324, %335 : vector<2x8xi32>
    %337 = vector.shape_cast %333 : vector<2x1xi32> to vector<2x1xi32>
    %338 = vector.broadcast %337 : vector<2x1xi32> to vector<2x8xi32>
    %339 = arith.select %336, %338, %334 : vector<2x8xi1>, vector<2x8xi32>
    %c14_121 = arith.constant 14 : index
    %c0_122 = arith.constant 0 : index
    %340 = vector.load %arg14[%c14_121, %c0_122] : memref<16x5xi32, #tpu.memory_space<vmem>>, vector<2x5xi32>
    %341 = vector.broadcast %333 : vector<2x1xi32> to vector<2x5xi32>
    %342 = arith.cmpi eq, %323, %341 : vector<2x5xi32>
    %c0_i32_123 = arith.constant 0 : i32
    %343 = vector.broadcast %c0_i32_123 : i32 to vector<2x5xi32>
    %344 = arith.select %342, %340, %343 : vector<2x5xi1>, vector<2x5xi32>
    %cst_124 = arith.constant dense<0> : vector<2xi32>
    %345 = vector.multi_reduction <add>, %344, %cst_124 [1] : vector<2x5xi32> to vector<2xi32>
    %346 = vector.shape_cast %345 : vector<2xi32> to vector<2x1xi32>
    %c6_i32 = arith.constant 6 : i32
    %347 = vector.broadcast %c6_i32 : i32 to vector<2x8xi32>
    %348 = arith.cmpi eq, %324, %347 : vector<2x8xi32>
    %349 = vector.shape_cast %346 : vector<2x1xi32> to vector<2x1xi32>
    %350 = vector.broadcast %349 : vector<2x1xi32> to vector<2x8xi32>
    %351 = arith.select %348, %350, %339 : vector<2x8xi1>, vector<2x8xi32>
    %c12_125 = arith.constant 12 : index
    %c0_126 = arith.constant 0 : index
    %352 = vector.load %arg14[%c12_125, %c0_126] : memref<16x5xi32, #tpu.memory_space<vmem>>, vector<2x5xi32>
    %353 = vector.broadcast %346 : vector<2x1xi32> to vector<2x5xi32>
    %354 = arith.cmpi eq, %323, %353 : vector<2x5xi32>
    %c0_i32_127 = arith.constant 0 : i32
    %355 = vector.broadcast %c0_i32_127 : i32 to vector<2x5xi32>
    %356 = arith.select %354, %352, %355 : vector<2x5xi1>, vector<2x5xi32>
    %cst_128 = arith.constant dense<0> : vector<2xi32>
    %357 = vector.multi_reduction <add>, %356, %cst_128 [1] : vector<2x5xi32> to vector<2xi32>
    %358 = vector.shape_cast %357 : vector<2xi32> to vector<2x1xi32>
    %c5_i32_129 = arith.constant 5 : i32
    %359 = vector.broadcast %c5_i32_129 : i32 to vector<2x8xi32>
    %360 = arith.cmpi eq, %324, %359 : vector<2x8xi32>
    %361 = vector.shape_cast %358 : vector<2x1xi32> to vector<2x1xi32>
    %362 = vector.broadcast %361 : vector<2x1xi32> to vector<2x8xi32>
    %363 = arith.select %360, %362, %351 : vector<2x8xi1>, vector<2x8xi32>
    %c10_130 = arith.constant 10 : index
    %c0_131 = arith.constant 0 : index
    %364 = vector.load %arg14[%c10_130, %c0_131] : memref<16x5xi32, #tpu.memory_space<vmem>>, vector<2x5xi32>
    %365 = vector.broadcast %358 : vector<2x1xi32> to vector<2x5xi32>
    %366 = arith.cmpi eq, %323, %365 : vector<2x5xi32>
    %c0_i32_132 = arith.constant 0 : i32
    %367 = vector.broadcast %c0_i32_132 : i32 to vector<2x5xi32>
    %368 = arith.select %366, %364, %367 : vector<2x5xi1>, vector<2x5xi32>
    %cst_133 = arith.constant dense<0> : vector<2xi32>
    %369 = vector.multi_reduction <add>, %368, %cst_133 [1] : vector<2x5xi32> to vector<2xi32>
    %370 = vector.shape_cast %369 : vector<2xi32> to vector<2x1xi32>
    %c4_i32 = arith.constant 4 : i32
    %371 = vector.broadcast %c4_i32 : i32 to vector<2x8xi32>
    %372 = arith.cmpi eq, %324, %371 : vector<2x8xi32>
    %373 = vector.shape_cast %370 : vector<2x1xi32> to vector<2x1xi32>
    %374 = vector.broadcast %373 : vector<2x1xi32> to vector<2x8xi32>
    %375 = arith.select %372, %374, %363 : vector<2x8xi1>, vector<2x8xi32>
    %c8_134 = arith.constant 8 : index
    %c0_135 = arith.constant 0 : index
    %376 = vector.load %arg14[%c8_134, %c0_135] : memref<16x5xi32, #tpu.memory_space<vmem>>, vector<2x5xi32>
    %377 = vector.broadcast %370 : vector<2x1xi32> to vector<2x5xi32>
    %378 = arith.cmpi eq, %323, %377 : vector<2x5xi32>
    %c0_i32_136 = arith.constant 0 : i32
    %379 = vector.broadcast %c0_i32_136 : i32 to vector<2x5xi32>
    %380 = arith.select %378, %376, %379 : vector<2x5xi1>, vector<2x5xi32>
    %cst_137 = arith.constant dense<0> : vector<2xi32>
    %381 = vector.multi_reduction <add>, %380, %cst_137 [1] : vector<2x5xi32> to vector<2xi32>
    %382 = vector.shape_cast %381 : vector<2xi32> to vector<2x1xi32>
    %c3_i32 = arith.constant 3 : i32
    %383 = vector.broadcast %c3_i32 : i32 to vector<2x8xi32>
    %384 = arith.cmpi eq, %324, %383 : vector<2x8xi32>
    %385 = vector.shape_cast %382 : vector<2x1xi32> to vector<2x1xi32>
    %386 = vector.broadcast %385 : vector<2x1xi32> to vector<2x8xi32>
    %387 = arith.select %384, %386, %375 : vector<2x8xi1>, vector<2x8xi32>
    %c6_138 = arith.constant 6 : index
    %c0_139 = arith.constant 0 : index
    %388 = vector.load %arg14[%c6_138, %c0_139] : memref<16x5xi32, #tpu.memory_space<vmem>>, vector<2x5xi32>
    %389 = vector.broadcast %382 : vector<2x1xi32> to vector<2x5xi32>
    %390 = arith.cmpi eq, %323, %389 : vector<2x5xi32>
    %c0_i32_140 = arith.constant 0 : i32
    %391 = vector.broadcast %c0_i32_140 : i32 to vector<2x5xi32>
    %392 = arith.select %390, %388, %391 : vector<2x5xi1>, vector<2x5xi32>
    %cst_141 = arith.constant dense<0> : vector<2xi32>
    %393 = vector.multi_reduction <add>, %392, %cst_141 [1] : vector<2x5xi32> to vector<2xi32>
    %394 = vector.shape_cast %393 : vector<2xi32> to vector<2x1xi32>
    %c2_i32 = arith.constant 2 : i32
    %395 = vector.broadcast %c2_i32 : i32 to vector<2x8xi32>
    %396 = arith.cmpi eq, %324, %395 : vector<2x8xi32>
    %397 = vector.shape_cast %394 : vector<2x1xi32> to vector<2x1xi32>
    %398 = vector.broadcast %397 : vector<2x1xi32> to vector<2x8xi32>
    %399 = arith.select %396, %398, %387 : vector<2x8xi1>, vector<2x8xi32>
    %c4_142 = arith.constant 4 : index
    %c0_143 = arith.constant 0 : index
    %400 = vector.load %arg14[%c4_142, %c0_143] : memref<16x5xi32, #tpu.memory_space<vmem>>, vector<2x5xi32>
    %401 = vector.broadcast %394 : vector<2x1xi32> to vector<2x5xi32>
    %402 = arith.cmpi eq, %323, %401 : vector<2x5xi32>
    %c0_i32_144 = arith.constant 0 : i32
    %403 = vector.broadcast %c0_i32_144 : i32 to vector<2x5xi32>
    %404 = arith.select %402, %400, %403 : vector<2x5xi1>, vector<2x5xi32>
    %cst_145 = arith.constant dense<0> : vector<2xi32>
    %405 = vector.multi_reduction <add>, %404, %cst_145 [1] : vector<2x5xi32> to vector<2xi32>
    %406 = vector.shape_cast %405 : vector<2xi32> to vector<2x1xi32>
    %c1_i32 = arith.constant 1 : i32
    %407 = vector.broadcast %c1_i32 : i32 to vector<2x8xi32>
    %408 = arith.cmpi eq, %324, %407 : vector<2x8xi32>
    %409 = vector.shape_cast %406 : vector<2x1xi32> to vector<2x1xi32>
    %410 = vector.broadcast %409 : vector<2x1xi32> to vector<2x8xi32>
    %411 = arith.select %408, %410, %399 : vector<2x8xi1>, vector<2x8xi32>
    %c2_146 = arith.constant 2 : index
    %c0_147 = arith.constant 0 : index
    %412 = vector.load %arg14[%c2_146, %c0_147] : memref<16x5xi32, #tpu.memory_space<vmem>>, vector<2x5xi32>
    %413 = vector.broadcast %406 : vector<2x1xi32> to vector<2x5xi32>
    %414 = arith.cmpi eq, %323, %413 : vector<2x5xi32>
    %c0_i32_148 = arith.constant 0 : i32
    %415 = vector.broadcast %c0_i32_148 : i32 to vector<2x5xi32>
    %416 = arith.select %414, %412, %415 : vector<2x5xi1>, vector<2x5xi32>
    %cst_149 = arith.constant dense<0> : vector<2xi32>
    %417 = vector.multi_reduction <add>, %416, %cst_149 [1] : vector<2x5xi32> to vector<2xi32>
    %418 = vector.shape_cast %417 : vector<2xi32> to vector<2x1xi32>
    %c0_i32_150 = arith.constant 0 : i32
    %419 = vector.broadcast %c0_i32_150 : i32 to vector<2x8xi32>
    %420 = arith.cmpi eq, %324, %419 : vector<2x8xi32>
    %421 = vector.shape_cast %418 : vector<2x1xi32> to vector<2x1xi32>
    %422 = vector.broadcast %421 : vector<2x1xi32> to vector<2x8xi32>
    %423 = arith.select %420, %422, %411 : vector<2x8xi1>, vector<2x8xi32>
    %c0_151 = arith.constant 0 : index
    %c0_152 = arith.constant 0 : index
    %424 = vector.load %arg10[%c0_151, %c0_152] : memref<2x8xi32, #tpu.memory_space<vmem>>, vector<2x8xi32>
    tpu.vector_store %arg10[%c0_151, %c0_152], %423 {strides = array<i32>} : memref<2x8xi32, #tpu.memory_space<vmem>>, vector<2x8xi32>,
    return
  }
}

</mosaic_0001>

<llo_original>
// kernel: _device_forward.1
$region0: #{_device_forward.1}
  #allocation0 [shape = 'u32[]', space=smem, size = 0x4, offset = 0x4, fixed_abs, tag = 'smem constant byte address 0x4 - core index']
  #allocation1 [shape = 'u32[144,128]{1,0:T(1,128)}', space=vmem, size = 0x12000, scoped, tag = 'internal scratch']
  #allocation2 [shape = 'f32[16,256]{1,0:T(8,128)}', space=vmem, size = 0x4000, scoped, tag = 'scratch operand']
  #allocation3 [shape = 'f32[16,64]{1,0:T(8,128)}', space=vmem, size = 0x2000, scoped, tag = 'scratch operand']
  #allocation4 [shape = 's32[16,5]{1,0:T(8,128)}', space=vmem, size = 0x2000, scoped, tag = 'scratch operand']
  %s0 = inlined_call_operand.vmem [shape: bf16[16,32], index: 0, kind: input, shape index: {}]
  %s1 = inlined_call_operand.vmem [shape: bf16[32,256], index: 1, kind: input, shape index: {}]
  %s2 = inlined_call_operand.vmem [shape: f32[1,256], index: 2, kind: input, shape index: {}]
  %s3 = inlined_call_operand.vmem [shape: bf16[64,256], index: 3, kind: input, shape index: {}]
  %s4 = inlined_call_operand.vmem [shape: f32[64,5], index: 4, kind: input, shape index: {}]
  %s5 = inlined_call_operand.vmem [shape: f32[1,5], index: 5, kind: input, shape index: {}]
  %s6 = inlined_call_operand.vmem [shape: f32[1,5], index: 6, kind: input, shape index: {}]
  %s7 = inlined_call_operand.vmem [shape: f32[5,5], index: 7, kind: input, shape index: {}]
  %s8 = inlined_call_operand.vmem [shape: f32[1,5], index: 8, kind: input, shape index: {}]
  %s9 = inlined_call_operand.vmem [shape: f32[16,5], index: 9, kind: output, shape index: {0}]
  %s10 = inlined_call_operand.hbm [shape: s32[2,8], index: 10, kind: output, shape index: {1}]
  %s11 = inlined_call_operand.vmem [shape: f32[2,1], index: 11, kind: output, shape index: {2}]
  %12 = xla_tuple %s9, %s10, %s11
  %s13 = sld [smem:[#allocation0]]
  $region62: #{_device_forward.1} parent=0
    _
  %s15 = ssub.s32 1, %s13
  %s16 = scalar_select 0, %s15, %s13
  $region1: #{_device_forward.1} parent=0
    #allocation5 [shape = 'u8[1024]{0}', space=vmem, size = 0x400, scoped, tag = 'output window, operand 1, single buffered']
    #allocation6 [shape = 's32[1]{0}', space=sflag, size = 0x4, scoped, tag = 'scoped memory for _device_forward.1']
    %17 = vsyncpa [#allocation6], 0
    // Predicated region
    $region2: #{_device_forward.1} parent=1 // pred_check
      _
    $region3: #{_device_forward.1} parent=1 // pred_check_branch
      %19 = sbr.rel (0) target = $region5
    $region4: #{_device_forward.1} parent=1 // pred_region
      _
    $region5: #{_device_forward.1} parent=1 // pred_fallthru
      _
    // Predicated region
    $region6: #{_device_forward.1} parent=1 // pred_check
      _
    $region7: #{_device_forward.1} parent=1 // pred_check_branch
      %21 = sbr.rel (0) target = $region9
    $region8: #{_device_forward.1} parent=1 // pred_region
      _
    $region9: #{_device_forward.1} parent=1 // pred_fallthru
      _
    // Predicated region
    $region10: #{_device_forward.1} parent=1 // pred_check
      _
    $region11: #{_device_forward.1} parent=1 // pred_check_branch
      %23 = sbr.rel (0) target = $region13
    $region12: #{_device_forward.1} parent=1 // pred_region
      _
    $region13: #{_device_forward.1} parent=1 // pred_fallthru
      _
    // Predicated region
    $region14: #{_device_forward.1} parent=1 // pred_check
      _
    $region15: #{_device_forward.1} parent=1 // pred_check_branch
      %25 = sbr.rel (0) target = $region17
    $region16: #{_device_forward.1} parent=1 // pred_region
      _
    $region17: #{_device_forward.1} parent=1 // pred_fallthru
      _
    // Predicated region
    $region18: #{_device_forward.1} parent=1 // pred_check
      _
    $region19: #{_device_forward.1} parent=1 // pred_check_branch
      %27 = sbr.rel (0) target = $region21
    $region20: #{_device_forward.1} parent=1 // pred_region
      _
    $region21: #{_device_forward.1} parent=1 // pred_fallthru
      _
    // Predicated region
    $region22: #{_device_forward.1} parent=1 // pred_check
      _
    $region23: #{_device_forward.1} parent=1 // pred_check_branch
      %29 = sbr.rel (0) target = $region25
    $region24: #{_device_forward.1} parent=1 // pred_region
      _
    $region25: #{_device_forward.1} parent=1 // pred_fallthru
      _
    // Predicated region
    $region26: #{_device_forward.1} parent=1 // pred_check
      _
    $region27: #{_device_forward.1} parent=1 // pred_check_branch
      %31 = sbr.rel (0) target = $region29
    $region28: #{_device_forward.1} parent=1 // pred_region
      _
    $region29: #{_device_forward.1} parent=1 // pred_fallthru
      _
    // Predicated region
    $region30: #{_device_forward.1} parent=1 // pred_check
      _
    $region31: #{_device_forward.1} parent=1 // pred_check_branch
      %33 = sbr.rel (0) target = $region33
    $region32: #{_device_forward.1} parent=1 // pred_region
      _
    $region33: #{_device_forward.1} parent=1 // pred_fallthru
      _
    // Predicated region
    $region34: #{_device_forward.1} parent=1 // pred_check
      _
    $region35: #{_device_forward.1} parent=1 // pred_check_branch
      %35 = sbr.rel (0) target = $region37
    $region36: #{_device_forward.1} parent=1 // pred_region
      _
    $region37: #{_device_forward.1} parent=1 // pred_fallthru
      _
    %v37 = vld [vmem:[%s0] sm:$0xf]
    %v38 = vld [vmem:[%s0 + $0x4] sm:$0xf]
    %v39 = vld [vmem:[%s1] sm:$0xff]
    %v40 = vld [vmem:[%s1 + $0x8] sm:$0xff]
    %v41 = vld [vmem:[%s1 + $0x10] sm:$0xff]
    %v42 = vld [vmem:[%s1 + $0x18] sm:$0xff]
    %v43 = vld [vmem:[%s2] sm:$0x3]
    %v45 = vlaneseq
    %v46 = vshrl.u32 %v45, 7
    %v47 = vsub.s32 0, %v46
    %v48 = vrot.slane %v43, %v47
    %v49 = vlaneseq
    %v50 = vshrl.u32 %v49, 7
    %v51 = vsub.s32 1, %v50
    %v52 = vrot.slane %v43, %v51
    %v57 = vunpack.c.l.b16 %v37
    %v58 = vunpack.c.l.b16 %v38
    %v59 = vpack.c.b16 %v58, %v57
    %v64 = vunpack.c.l.b16 %v39
    %v65 = vunpack.c.h.b16 %v39
    %v66 = vunpack.c.l.b16 %v40
    %v67 = vunpack.c.h.b16 %v40
    %v68 = vunpack.c.l.b16 %v41
    %v69 = vunpack.c.h.b16 %v41
    %v70 = vunpack.c.l.b16 %v42
    %v71 = vunpack.c.h.b16 %v42
    %v72 = vpack.c.b16 %v66, %v64
    %v73 = vpack.c.b16 %v67, %v65
    %v74 = vpack.c.b16 %v70, %v68
    %v75 = vpack.c.b16 %v71, %v69
    %vm80 = vcmask 261120
    %v82 = vsel %vm80, %v59, 0
    %84 = vmatprep.subr.bf16.mxu0 %v73
    %85 = vmatpush1.bf16.msra.mxu0 %v72
    %86 = vmatprep.subr.bf16.mxu0 %v75
    %87 = vmatpush1.bf16.msra.mxu0 %v74
    %88 = vmatprep.subr.bf16.mxu0 0
    %89 = vmatpush1.bf16.msra.mxu0 0
    %90 = vmatprep.subr.bf16.mxu0 0
    %91 = vmatpush1.bf16.msra.mxu0 0
    %92 = vmatprep.subr.bf16.mxu0 0
    %93 = vmatpush1.bf16.msra.mxu0 0
    %94 = vmatprep.subr.bf16.mxu0 0
    %95 = vmatpush1.bf16.msra.mxu0 0
    %96 = vmatprep.subr.bf16.mxu0 0
    %97 = vmatpush1.bf16.msra.mxu0 0
    %98 = vmatprep.subr.bf16.mxu0 0
    %99 = vmatpush1.bf16.msra.mxu0 0
    %100 = vmatprep.subr.bf16.mxu0 0
    %101 = vmatpush1.bf16.msra.mxu0 0
    %102 = vmatprep.subr.bf16.mxu0 0
    %103 = vmatpush1.bf16.msra.mxu0 0
    %104 = vmatprep.subr.bf16.mxu0 0
    %105 = vmatpush1.bf16.msra.mxu0 0
    %106 = vmatprep.subr.bf16.mxu0 0
    %107 = vmatpush1.bf16.msra.mxu0 0
    %108 = vmatprep.subr.bf16.mxu0 0
    %109 = vmatpush1.bf16.msra.mxu0 0
    %110 = vmatprep.subr.bf16.mxu0 0
    %111 = vmatpush1.bf16.msra.mxu0 0
    %112 = vmatprep.subr.bf16.mxu0 0
    %113 = vmatpush1.bf16.msra.mxu0 0
    %114 = vmatprep.subr.bf16.mxu0 0
    %115 = vmatpush1.bf16.msra.mxu0 0
    %116 = vmatprep.mubr.bf16.mxu0 0
    %117 = vmatmul.mubr.bf16.gmra.mrb[0].mxu0 %v82
    %v118 = vpop.f32.mrb[0].mxu0
    %v119 = vadd.f32 %v48, %v118
    %v120 = vpop.f32.mrb[0].mxu0
    %v121 = vadd.f32 %v52, %v120
    %v122 = vpop.f32.mrb[0].mxu0
    %v123 = vadd.f32 %v48, %v122
    %v124 = vpop.f32.mrb[0].mxu0
    %v125 = vadd.f32 %v52, %v124
    %126 = vdwg.mxu0
    %127 = vst [vmem:[#allocation2] sm:$0xff] %v119
    %128 = vst [vmem:[#allocation2 + $0x8] sm:$0xff] %v121
    %129 = vst [vmem:[#allocation2 + $0x10] sm:$0xff] %v123
    %130 = vst [vmem:[#allocation2 + $0x18] sm:$0xff] %v125
    %v131 = vld [vmem:[%s3] sm:$0xff]
    %v132 = vld [vmem:[%s3 + $0x8] sm:$0xff]
    %v133 = vld [vmem:[%s3 + $0x10] sm:$0xff]
    %v134 = vld [vmem:[%s3 + $0x18] sm:$0xff]
    %v135 = vld [vmem:[%s3 + $0x20] sm:$0xff]
    %v136 = vld [vmem:[%s3 + $0x28] sm:$0xff]
    %v137 = vld [vmem:[%s3 + $0x30] sm:$0xff]
    %v138 = vld [vmem:[%s3 + $0x38] sm:$0xff]
    %v139 = vld [vmem:[#allocation2] sm:$0x3]
    %v140 = vld [vmem:[#allocation2 + $0x8] sm:$0x3]
    %v149 = vunpack.c.l.b16 %v131
    %v150 = vunpack.c.h.b16 %v131
    %v151 = vunpack.c.l.b16 %v132
    %v152 = vunpack.c.h.b16 %v132
    %v153 = vunpack.c.l.b16 %v133
    %v154 = vunpack.c.h.b16 %v133
    %v155 = vunpack.c.l.b16 %v134
    %v156 = vunpack.c.h.b16 %v134
    %v157 = vunpack.c.l.b16 %v135
    %v158 = vunpack.c.h.b16 %v135
    %v159 = vunpack.c.l.b16 %v136
    %v160 = vunpack.c.h.b16 %v136
    %v161 = vunpack.c.l.b16 %v137
    %v162 = vunpack.c.h.b16 %v137
    %v163 = vunpack.c.l.b16 %v138
    %v164 = vunpack.c.h.b16 %v138
    %v165 = vpack.c.b16 %v151, %v149
    %v166 = vpack.c.b16 %v152, %v150
    %v167 = vpack.c.b16 %v155, %v153
    %v168 = vpack.c.b16 %v156, %v154
    %v169 = vpack.c.b16 %v159, %v157
    %v170 = vpack.c.b16 %v160, %v158
    %v171 = vpack.c.b16 %v163, %v161
    %v172 = vpack.c.b16 %v164, %v162
    %vm181 = vcmask 523264
    %v183 = vsel %vm181, 0, 0
    %185 = vmatprep.subr.bf16.mxu0 %v166
    %186 = vmatpush1.bf16.msra.mxu0 %v165
    %187 = vmatprep.subr.bf16.mxu0 %v168
    %188 = vmatpush1.bf16.msra.mxu0 %v167
    %189 = vmatprep.subr.bf16.mxu0 %v170
    %190 = vmatpush1.bf16.msra.mxu0 %v169
    %191 = vmatprep.subr.bf16.mxu0 %v172
    %192 = vmatpush1.bf16.msra.mxu0 %v171
    %193 = vmatprep.subr.bf16.mxu0 0
    %194 = vmatpush1.bf16.msra.mxu0 0
    %195 = vmatprep.subr.bf16.mxu0 0
    %196 = vmatpush1.bf16.msra.mxu0 0
    %197 = vmatprep.subr.bf16.mxu0 0
    %198 = vmatpush1.bf16.msra.mxu0 0
    %199 = vmatprep.subr.bf16.mxu0 0
    %200 = vmatpush1.bf16.msra.mxu0 0
    %201 = vmatprep.subr.bf16.mxu0 0
    %202 = vmatpush1.bf16.msra.mxu0 0
    %203 = vmatprep.subr.bf16.mxu0 0
    %204 = vmatpush1.bf16.msra.mxu0 0
    %205 = vmatprep.subr.bf16.mxu0 0
    %206 = vmatpush1.bf16.msra.mxu0 0
    %207 = vmatprep.subr.bf16.mxu0 0
    %208 = vmatpush1.bf16.msra.mxu0 0
    %209 = vmatprep.subr.bf16.mxu0 0
    %210 = vmatpush1.bf16.msra.mxu0 0
    %211 = vmatprep.subr.bf16.mxu0 0
    %212 = vmatpush1.bf16.msra.mxu0 0
    %213 = vmatprep.subr.bf16.mxu0 0
    %214 = vmatpush1.bf16.msra.mxu0 0
    %215 = vmatprep.subr.bf16.mxu0 0
    %216 = vmatpush1.bf16.msra.mxu0 0
    %217 = vmatprep.mubr.bf16.mxu0 0
    %218 = vmatmul.mubr.bf16.gmra.mrb[0].mxu0 %v183
    %v219 = vpop.f32.mrb[0].mxu0
    %v220 = vadd.f32 %v139, %v219
    %v221 = vpop.f32.mrb[0].mxu0
    %v222 = vadd.f32 %v140, %v221
    %v223 = vpop.f32.mrb[0].mxu0
    %v224 = vpop.f32.mrb[0].mxu0
    %225 = vdwg.mxu0
    %v226 = vxor.u32 %v220, 2147483648
    %v227 = vxor.u32 %v222, 2147483648
    %v228 = vmul.f32 %v226, 1.442695
    %v229 = vpow.pop %v228
    %v230 = vmul.f32 %v227, 1.442695
    %v231 = vpow.pop %v230
    %v232 = vadd.f32 %v229, 1.0
    %v233 = vadd.f32 %v231, 1.0
    %v234 = vrcp.pop %v232
    %v235 = vmul.f32 1.0, %v234
    %v236 = vrcp.pop %v233
    %v237 = vmul.f32 1.0, %v236
    %v238 = vtanh.pop %v222
    %v239 = vmul.f32 %v235, 0.0
    %241 = vrot.lane.b32.xlu0 %v238, 64
    %v242 = vpop.permute.xlu0 %241
    %v244 = vmul.f32 %v235, %v242
    %246 = vrot.lane.b32.xlu0 %v244, 64
    %v247 = vpop.permute.xlu0 %246
    %v249 = vadd.f32 %v239, %v247
    %v250 = vtanh.pop %v249
    %252 = vrot.lane.b32.xlu0 %v250, 64
    %v253 = vpop.permute.xlu0 %252
    %v255 = vmul.f32 %v237, %v253
    %vm256 = vcmask 254976
    %257 = vst.msk [vmem:[#allocation3] sm:$0x3] %vm256, %v255
    %vm258 = vcmask 517376
    %259 = vst.msk [vmem:[#allocation3 + $0xe] sm:$0x3] %vm258, %v255
    %v260 = vpack.c.bf16 %v255, %v255
    %v261 = vld [vmem:[#allocation2] sm:$0xc]
    %v262 = vld [vmem:[#allocation2 + $0x8] sm:$0xc]
    %v265 = vrot.slane %v261, 2
    %v266 = vrot.slane %v262, 2
    %v270 = vsel %vm181, %v260, 0
    %272 = vmatprep.subr.bf16.mxu0 %v166
    %273 = vmatpush1.bf16.msra.mxu0 %v165
    %274 = vmatprep.subr.bf16.mxu0 %v168
    %275 = vmatpush1.bf16.msra.mxu0 %v167
    %276 = vmatprep.subr.bf16.mxu0 %v170
    %277 = vmatpush1.bf16.msra.mxu0 %v169
    %278 = vmatprep.subr.bf16.mxu0 %v172
    %279 = vmatpush1.bf16.msra.mxu0 %v171
    %280 = vmatprep.subr.bf16.mxu0 0
    %281 = vmatpush1.bf16.msra.mxu0 0
    %282 = vmatprep.subr.bf16.mxu0 0
    %283 = vmatpush1.bf16.msra.mxu0 0
    %284 = vmatprep.subr.bf16.mxu0 0
    %285 = vmatpush1.bf16.msra.mxu0 0
    %286 = vmatprep.subr.bf16.mxu0 0
    %287 = vmatpush1.bf16.msra.mxu0 0
    %288 = vmatprep.subr.bf16.mxu0 0
    %289 = vmatpush1.bf16.msra.mxu0 0
    %290 = vmatprep.subr.bf16.mxu0 0
    %291 = vmatpush1.bf16.msra.mxu0 0
    %292 = vmatprep.subr.bf16.mxu0 0
    %293 = vmatpush1.bf16.msra.mxu0 0
    %294 = vmatprep.subr.bf16.mxu0 0
    %295 = vmatpush1.bf16.msra.mxu0 0
    %296 = vmatprep.subr.bf16.mxu0 0
    %297 = vmatpush1.bf16.msra.mxu0 0
    %298 = vmatprep.subr.bf16.mxu0 0
    %299 = vmatpush1.bf16.msra.mxu0 0
    %300 = vmatprep.subr.bf16.mxu0 0
    %301 = vmatpush1.bf16.msra.mxu0 0
    %302 = vmatprep.subr.bf16.mxu0 0
    %303 = vmatpush1.bf16.msra.mxu0 0
    %304 = vmatprep.mubr.bf16.mxu0 0
    %305 = vmatmul.mubr.bf16.gmra.mrb[0].mxu0 %v270
    %v306 = vpop.f32.mrb[0].mxu0
    %v307 = vadd.f32 %v265, %v306
    %v308 = vpop.f32.mrb[0].mxu0
    %v309 = vadd.f32 %v266, %v308
    %v310 = vpop.f32.mrb[0].mxu0
    %v311 = vpop.f32.mrb[0].mxu0
    %312 = vdwg.mxu0
    %v313 = vxor.u32 %v307, 2147483648
    %v314 = vxor.u32 %v309, 2147483648
    %v315 = vmul.f32 %v313, 1.442695
    %v316 = vpow.pop %v315
    %v317 = vmul.f32 %v314, 1.442695
    %v318 = vpow.pop %v317
    %v319 = vadd.f32 %v316, 1.0
    %v320 = vadd.f32 %v318, 1.0
    %v321 = vrcp.pop %v319
    %v322 = vmul.f32 1.0, %v321
    %v323 = vrcp.pop %v320
    %v324 = vmul.f32 1.0, %v323
    %v325 = vtanh.pop %v309
    %v326 = vmul.f32 %v322, %v249
    %328 = vrot.lane.b32.xlu0 %v325, 64
    %v329 = vpop.permute.xlu0 %328
    %v331 = vmul.f32 %v322, %v329
    %333 = vrot.lane.b32.xlu0 %v331, 64
    %v334 = vpop.permute.xlu0 %333
    %v336 = vadd.f32 %v326, %v334
    %v337 = vtanh.pop %v336
    %339 = vrot.lane.b32.xlu0 %v337, 64
    %v340 = vpop.permute.xlu0 %339
    %v342 = vmul.f32 %v324, %v340
    %343 = vst.msk [vmem:[#allocation3 + $0x2] sm:$0x3] %vm256, %v342
    %344 = vst.msk [vmem:[#allocation3 + $0xc] sm:$0x3] %vm258, %v342
    %v345 = vpack.c.bf16 %v342, %v342
    %v346 = vld [vmem:[#allocation2] sm:$0x30]
    %v347 = vld [vmem:[#allocation2 + $0x8] sm:$0x30]
    %v350 = vrot.slane %v346, 4
    %v351 = vrot.slane %v347, 4
    %v355 = vsel %vm181, %v345, 0
    %357 = vmatprep.subr.bf16.mxu0 %v166
    %358 = vmatpush1.bf16.msra.mxu0 %v165
    %359 = vmatprep.subr.bf16.mxu0 %v168
    %360 = vmatpush1.bf16.msra.mxu0 %v167
    %361 = vmatprep.subr.bf16.mxu0 %v170
    %362 = vmatpush1.bf16.msra.mxu0 %v169
    %363 = vmatprep.subr.bf16.mxu0 %v172
    %364 = vmatpush1.bf16.msra.mxu0 %v171
    %365 = vmatprep.subr.bf16.mxu0 0
    %366 = vmatpush1.bf16.msra.mxu0 0
    %367 = vmatprep.subr.bf16.mxu0 0
    %368 = vmatpush1.bf16.msra.mxu0 0
    %369 = vmatprep.subr.bf16.mxu0 0
    %370 = vmatpush1.bf16.msra.mxu0 0
    %371 = vmatprep.subr.bf16.mxu0 0
    %372 = vmatpush1.bf16.msra.mxu0 0
    %373 = vmatprep.subr.bf16.mxu0 0
    %374 = vmatpush1.bf16.msra.mxu0 0
    %375 = vmatprep.subr.bf16.mxu0 0
    %376 = vmatpush1.bf16.msra.mxu0 0
    %377 = vmatprep.subr.bf16.mxu0 0
    %378 = vmatpush1.bf16.msra.mxu0 0
    %379 = vmatprep.subr.bf16.mxu0 0
    %380 = vmatpush1.bf16.msra.mxu0 0
    %381 = vmatprep.subr.bf16.mxu0 0
    %382 = vmatpush1.bf16.msra.mxu0 0
    %383 = vmatprep.subr.bf16.mxu0 0
    %384 = vmatpush1.bf16.msra.mxu0 0
    %385 = vmatprep.subr.bf16.mxu0 0
    %386 = vmatpush1.bf16.msra.mxu0 0
    %387 = vmatprep.subr.bf16.mxu0 0
    %388 = vmatpush1.bf16.msra.mxu0 0
    %389 = vmatprep.mubr.bf16.mxu0 0
    %390 = vmatmul.mubr.bf16.gmra.mrb[0].mxu0 %v355
    %v391 = vpop.f32.mrb[0].mxu0
    %v392 = vadd.f32 %v350, %v391
    %v393 = vpop.f32.mrb[0].mxu0
    %v394 = vadd.f32 %v351, %v393
    %v395 = vpop.f32.mrb[0].mxu0
    %v396 = vpop.f32.mrb[0].mxu0
    %397 = vdwg.mxu0
    %v398 = vxor.u32 %v392, 2147483648
    %v399 = vxor.u32 %v394, 2147483648
    %v400 = vmul.f32 %v398, 1.442695
    %v401 = vpow.pop %v400
    %v402 = vmul.f32 %v399, 1.442695
    %v403 = vpow.pop %v402
    %v404 = vadd.f32 %v401, 1.0
    %v405 = vadd.f32 %v403, 1.0
    %v406 = vrcp.pop %v404
    %v407 = vmul.f32 1.0, %v406
    %v408 = vrcp.pop %v405
    %v409 = vmul.f32 1.0, %v408
    %v410 = vtanh.pop %v394
    %v411 = vmul.f32 %v407, %v336
    %413 = vrot.lane.b32.xlu0 %v410, 64
    %v414 = vpop.permute.xlu0 %413
    %v416 = vmul.f32 %v407, %v414
    %418 = vrot.lane.b32.xlu0 %v416, 64
    %v419 = vpop.permute.xlu0 %418
    %v421 = vadd.f32 %v411, %v419
    %v422 = vtanh.pop %v421
    %424 = vrot.lane.b32.xlu0 %v422, 64
    %v425 = vpop.permute.xlu0 %424
    %v427 = vmul.f32 %v409, %v425
    %428 = vst.msk [vmem:[#allocation3 + $0x4] sm:$0x3] %vm256, %v427
    %429 = vst.msk [vmem:[#allocation3 + $0xa] sm:$0x3] %vm258, %v427
    %v430 = vpack.c.bf16 %v427, %v427
    %v431 = vld [vmem:[#allocation2] sm:$0xc0]
    %v432 = vld [vmem:[#allocation2 + $0x8] sm:$0xc0]
    %v435 = vrot.slane %v431, 6
    %v436 = vrot.slane %v432, 6
    %v440 = vsel %vm181, %v430, 0
    %442 = vmatprep.subr.bf16.mxu0 %v166
    %443 = vmatpush1.bf16.msra.mxu0 %v165
    %444 = vmatprep.subr.bf16.mxu0 %v168
    %445 = vmatpush1.bf16.msra.mxu0 %v167
    %446 = vmatprep.subr.bf16.mxu0 %v170
    %447 = vmatpush1.bf16.msra.mxu0 %v169
    %448 = vmatprep.subr.bf16.mxu0 %v172
    %449 = vmatpush1.bf16.msra.mxu0 %v171
    %450 = vmatprep.subr.bf16.mxu0 0
    %451 = vmatpush1.bf16.msra.mxu0 0
    %452 = vmatprep.subr.bf16.mxu0 0
    %453 = vmatpush1.bf16.msra.mxu0 0
    %454 = vmatprep.subr.bf16.mxu0 0
    %455 = vmatpush1.bf16.msra.mxu0 0
    %456 = vmatprep.subr.bf16.mxu0 0
    %457 = vmatpush1.bf16.msra.mxu0 0
    %458 = vmatprep.subr.bf16.mxu0 0
    %459 = vmatpush1.bf16.msra.mxu0 0
    %460 = vmatprep.subr.bf16.mxu0 0
    %461 = vmatpush1.bf16.msra.mxu0 0
    %462 = vmatprep.subr.bf16.mxu0 0
    %463 = vmatpush1.bf16.msra.mxu0 0
    %464 = vmatprep.subr.bf16.mxu0 0
    %465 = vmatpush1.bf16.msra.mxu0 0
    %466 = vmatprep.subr.bf16.mxu0 0
    %467 = vmatpush1.bf16.msra.mxu0 0
    %468 = vmatprep.subr.bf16.mxu0 0
    %469 = vmatpush1.bf16.msra.mxu0 0
    %470 = vmatprep.subr.bf16.mxu0 0
    %471 = vmatpush1.bf16.msra.mxu0 0
    %472 = vmatprep.subr.bf16.mxu0 0
    %473 = vmatpush1.bf16.msra.mxu0 0
    %474 = vmatprep.mubr.bf16.mxu0 0
    %475 = vmatmul.mubr.bf16.gmra.mrb[0].mxu0 %v440
    %v476 = vpop.f32.mrb[0].mxu0
    %v477 = vadd.f32 %v435, %v476
    %v478 = vpop.f32.mrb[0].mxu0
    %v479 = vadd.f32 %v436, %v478
    %v480 = vpop.f32.mrb[0].mxu0
    %v481 = vpop.f32.mrb[0].mxu0
    %482 = vdwg.mxu0
    %v483 = vxor.u32 %v477, 2147483648
    %v484 = vxor.u32 %v479, 2147483648
    %v485 = vmul.f32 %v483, 1.442695
    %v486 = vpow.pop %v485
    %v487 = vmul.f32 %v484, 1.442695
    %v488 = vpow.pop %v487
    %v489 = vadd.f32 %v486, 1.0
    %v490 = vadd.f32 %v488, 1.0
    %v491 = vrcp.pop %v489
    %v492 = vmul.f32 1.0, %v491
    %v493 = vrcp.pop %v490
    %v494 = vmul.f32 1.0, %v493
    %v495 = vtanh.pop %v479
    %v496 = vmul.f32 %v492, %v421
    %498 = vrot.lane.b32.xlu0 %v495, 64
    %v499 = vpop.permute.xlu0 %498
    %v501 = vmul.f32 %v492, %v499
    %503 = vrot.lane.b32.xlu0 %v501, 64
    %v504 = vpop.permute.xlu0 %503
    %v506 = vadd.f32 %v496, %v504
    %v507 = vtanh.pop %v506
    %509 = vrot.lane.b32.xlu0 %v507, 64
    %v510 = vpop.permute.xlu0 %509
    %v512 = vmul.f32 %v494, %v510
    %513 = vst.msk [vmem:[#allocation3 + $0x6] sm:$0x3] %vm256, %v512
    %514 = vst.msk [vmem:[#allocation3 + $0x8] sm:$0x3] %vm258, %v512
    %v515 = vpack.c.bf16 %v512, %v512
    %v516 = vld [vmem:[#allocation2 + $0x10] sm:$0x3]
    %v517 = vld [vmem:[#allocation2 + $0x18] sm:$0x3]
    %v519 = vsel %vm181, %v515, 0
    %521 = vmatprep.subr.bf16.mxu0 %v166
    %522 = vmatpush1.bf16.msra.mxu0 %v165
    %523 = vmatprep.subr.bf16.mxu0 %v168
    %524 = vmatpush1.bf16.msra.mxu0 %v167
    %525 = vmatprep.subr.bf16.mxu0 %v170
    %526 = vmatpush1.bf16.msra.mxu0 %v169
    %527 = vmatprep.subr.bf16.mxu0 %v172
    %528 = vmatpush1.bf16.msra.mxu0 %v171
    %529 = vmatprep.subr.bf16.mxu0 0
    %530 = vmatpush1.bf16.msra.mxu0 0
    %531 = vmatprep.subr.bf16.mxu0 0
    %532 = vmatpush1.bf16.msra.mxu0 0
    %533 = vmatprep.subr.bf16.mxu0 0
    %534 = vmatpush1.bf16.msra.mxu0 0
    %535 = vmatprep.subr.bf16.mxu0 0
    %536 = vmatpush1.bf16.msra.mxu0 0
    %537 = vmatprep.subr.bf16.mxu0 0
    %538 = vmatpush1.bf16.msra.mxu0 0
    %539 = vmatprep.subr.bf16.mxu0 0
    %540 = vmatpush1.bf16.msra.mxu0 0
    %541 = vmatprep.subr.bf16.mxu0 0
    %542 = vmatpush1.bf16.msra.mxu0 0
    %543 = vmatprep.subr.bf16.mxu0 0
    %544 = vmatpush1.bf16.msra.mxu0 0
    %545 = vmatprep.subr.bf16.mxu0 0
    %546 = vmatpush1.bf16.msra.mxu0 0
    %547 = vmatprep.subr.bf16.mxu0 0
    %548 = vmatpush1.bf16.msra.mxu0 0
    %549 = vmatprep.subr.bf16.mxu0 0
    %550 = vmatpush1.bf16.msra.mxu0 0
    %551 = vmatprep.subr.bf16.mxu0 0
    %552 = vmatpush1.bf16.msra.mxu0 0
    %553 = vmatprep.mubr.bf16.mxu0 0
    %554 = vmatmul.mubr.bf16.gmra.mrb[0].mxu0 %v519
    %v555 = vpop.f32.mrb[0].mxu0
    %v556 = vadd.f32 %v516, %v555
    %v557 = vpop.f32.mrb[0].mxu0
    %v558 = vadd.f32 %v517, %v557
    %v559 = vpop.f32.mrb[0].mxu0
    %v560 = vpop.f32.mrb[0].mxu0
    %561 = vdwg.mxu0
    %v562 = vxor.u32 %v556, 2147483648
    %v563 = vxor.u32 %v558, 2147483648
    %v564 = vmul.f32 %v562, 1.442695
    %v565 = vpow.pop %v564
    %v566 = vmul.f32 %v563, 1.442695
    %v567 = vpow.pop %v566
    %v568 = vadd.f32 %v565, 1.0
    %v569 = vadd.f32 %v567, 1.0
    %v570 = vrcp.pop %v568
    %v571 = vmul.f32 1.0, %v570
    %v572 = vrcp.pop %v569
    %v573 = vmul.f32 1.0, %v572
    %v574 = vtanh.pop %v558
    %v575 = vmul.f32 %v571, %v506
    %577 = vrot.lane.b32.xlu0 %v574, 64
    %v578 = vpop.permute.xlu0 %577
    %v580 = vmul.f32 %v571, %v578
    %582 = vrot.lane.b32.xlu0 %v580, 64
    %v583 = vpop.permute.xlu0 %582
    %v585 = vadd.f32 %v575, %v583
    %v586 = vtanh.pop %v585
    %588 = vrot.lane.b32.xlu0 %v586, 64
    %v589 = vpop.permute.xlu0 %588
    %v591 = vmul.f32 %v573, %v589
    %592 = vst.msk [vmem:[#allocation3 + $0x8] sm:$0x3] %vm256, %v591
    %593 = vst.msk [vmem:[#allocation3 + $0x6] sm:$0x3] %vm258, %v591
    %v594 = vpack.c.bf16 %v591, %v591
    %v595 = vld [vmem:[#allocation2 + $0x10] sm:$0xc]
    %v596 = vld [vmem:[#allocation2 + $0x18] sm:$0xc]
    %v599 = vrot.slane %v595, 2
    %v600 = vrot.slane %v596, 2
    %v604 = vsel %vm181, %v594, 0
    %606 = vmatprep.subr.bf16.mxu0 %v166
    %607 = vmatpush1.bf16.msra.mxu0 %v165
    %608 = vmatprep.subr.bf16.mxu0 %v168
    %609 = vmatpush1.bf16.msra.mxu0 %v167
    %610 = vmatprep.subr.bf16.mxu0 %v170
    %611 = vmatpush1.bf16.msra.mxu0 %v169
    %612 = vmatprep.subr.bf16.mxu0 %v172
    %613 = vmatpush1.bf16.msra.mxu0 %v171
    %614 = vmatprep.subr.bf16.mxu0 0
    %615 = vmatpush1.bf16.msra.mxu0 0
    %616 = vmatprep.subr.bf16.mxu0 0
    %617 = vmatpush1.bf16.msra.mxu0 0
    %618 = vmatprep.subr.bf16.mxu0 0
    %619 = vmatpush1.bf16.msra.mxu0 0
    %620 = vmatprep.subr.bf16.mxu0 0
    %621 = vmatpush1.bf16.msra.mxu0 0
    %622 = vmatprep.subr.bf16.mxu0 0
    %623 = vmatpush1.bf16.msra.mxu0 0
    %624 = vmatprep.subr.bf16.mxu0 0
    %625 = vmatpush1.bf16.msra.mxu0 0
    %626 = vmatprep.subr.bf16.mxu0 0
    %627 = vmatpush1.bf16.msra.mxu0 0
    %628 = vmatprep.subr.bf16.mxu0 0
    %629 = vmatpush1.bf16.msra.mxu0 0
    %630 = vmatprep.subr.bf16.mxu0 0
    %631 = vmatpush1.bf16.msra.mxu0 0
    %632 = vmatprep.subr.bf16.mxu0 0
    %633 = vmatpush1.bf16.msra.mxu0 0
    %634 = vmatprep.subr.bf16.mxu0 0
    %635 = vmatpush1.bf16.msra.mxu0 0
    %636 = vmatprep.subr.bf16.mxu0 0
    %637 = vmatpush1.bf16.msra.mxu0 0
    %638 = vmatprep.mubr.bf16.mxu0 0
    %639 = vmatmul.mubr.bf16.gmra.mrb[0].mxu0 %v604
    %v640 = vpop.f32.mrb[0].mxu0
    %v641 = vadd.f32 %v599, %v640
    %v642 = vpop.f32.mrb[0].mxu0
    %v643 = vadd.f32 %v600, %v642
    %v644 = vpop.f32.mrb[0].mxu0
    %v645 = vpop.f32.mrb[0].mxu0
    %646 = vdwg.mxu0
    %v647 = vxor.u32 %v641, 2147483648
    %v648 = vxor.u32 %v643, 2147483648
    %v649 = vmul.f32 %v647, 1.442695
    %v650 = vpow.pop %v649
    %v651 = vmul.f32 %v648, 1.442695
    %v652 = vpow.pop %v651
    %v653 = vadd.f32 %v650, 1.0
    %v654 = vadd.f32 %v652, 1.0
    %v655 = vrcp.pop %v653
    %v656 = vmul.f32 1.0, %v655
    %v657 = vrcp.pop %v654
    %v658 = vmul.f32 1.0, %v657
    %v659 = vtanh.pop %v643
    %v660 = vmul.f32 %v656, %v585
    %662 = vrot.lane.b32.xlu0 %v659, 64
    %v663 = vpop.permute.xlu0 %662
    %v665 = vmul.f32 %v656, %v663
    %667 = vrot.lane.b32.xlu0 %v665, 64
    %v668 = vpop.permute.xlu0 %667
    %v670 = vadd.f32 %v660, %v668
    %v671 = vtanh.pop %v670
    %673 = vrot.lane.b32.xlu0 %v671, 64
    %v674 = vpop.permute.xlu0 %673
    %v676 = vmul.f32 %v658, %v674
    %677 = vst.msk [vmem:[#allocation3 + $0xa] sm:$0x3] %vm256, %v676
    %678 = vst.msk [vmem:[#allocation3 + $0x4] sm:$0x3] %vm258, %v676
    %v679 = vpack.c.bf16 %v676, %v676
    %v680 = vld [vmem:[#allocation2 + $0x10] sm:$0x30]
    %v681 = vld [vmem:[#allocation2 + $0x18] sm:$0x30]
    %v684 = vrot.slane %v680, 4
    %v685 = vrot.slane %v681, 4
    %v689 = vsel %vm181, %v679, 0
    %691 = vmatprep.subr.bf16.mxu0 %v166
    %692 = vmatpush1.bf16.msra.mxu0 %v165
    %693 = vmatprep.subr.bf16.mxu0 %v168
    %694 = vmatpush1.bf16.msra.mxu0 %v167
    %695 = vmatprep.subr.bf16.mxu0 %v170
    %696 = vmatpush1.bf16.msra.mxu0 %v169
    %697 = vmatprep.subr.bf16.mxu0 %v172
    %698 = vmatpush1.bf16.msra.mxu0 %v171
    %699 = vmatprep.subr.bf16.mxu0 0
    %700 = vmatpush1.bf16.msra.mxu0 0
    %701 = vmatprep.subr.bf16.mxu0 0
    %702 = vmatpush1.bf16.msra.mxu0 0
    %703 = vmatprep.subr.bf16.mxu0 0
    %704 = vmatpush1.bf16.msra.mxu0 0
    %705 = vmatprep.subr.bf16.mxu0 0
    %706 = vmatpush1.bf16.msra.mxu0 0
    %707 = vmatprep.subr.bf16.mxu0 0
    %708 = vmatpush1.bf16.msra.mxu0 0
    %709 = vmatprep.subr.bf16.mxu0 0
    %710 = vmatpush1.bf16.msra.mxu0 0
    %711 = vmatprep.subr.bf16.mxu0 0
    %712 = vmatpush1.bf16.msra.mxu0 0
    %713 = vmatprep.subr.bf16.mxu0 0
    %714 = vmatpush1.bf16.msra.mxu0 0
    %715 = vmatprep.subr.bf16.mxu0 0
    %716 = vmatpush1.bf16.msra.mxu0 0
    %717 = vmatprep.subr.bf16.mxu0 0
    %718 = vmatpush1.bf16.msra.mxu0 0
    %719 = vmatprep.subr.bf16.mxu0 0
    %720 = vmatpush1.bf16.msra.mxu0 0
    %721 = vmatprep.subr.bf16.mxu0 0
    %722 = vmatpush1.bf16.msra.mxu0 0
    %723 = vmatprep.mubr.bf16.mxu0 0
    %724 = vmatmul.mubr.bf16.gmra.mrb[0].mxu0 %v689
    %v725 = vpop.f32.mrb[0].mxu0
    %v726 = vadd.f32 %v684, %v725
    %v727 = vpop.f32.mrb[0].mxu0
    %v728 = vadd.f32 %v685, %v727
    %v729 = vpop.f32.mrb[0].mxu0
    %v730 = vpop.f32.mrb[0].mxu0
    %731 = vdwg.mxu0
    %v732 = vxor.u32 %v726, 2147483648
    %v733 = vxor.u32 %v728, 2147483648
    %v734 = vmul.f32 %v732, 1.442695
    %v735 = vpow.pop %v734
    %v736 = vmul.f32 %v733, 1.442695
    %v737 = vpow.pop %v736
    %v738 = vadd.f32 %v735, 1.0
    %v739 = vadd.f32 %v737, 1.0
    %v740 = vrcp.pop %v738
    %v741 = vmul.f32 1.0, %v740
    %v742 = vrcp.pop %v739
    %v743 = vmul.f32 1.0, %v742
    %v744 = vtanh.pop %v728
    %v745 = vmul.f32 %v741, %v670
    %747 = vrot.lane.b32.xlu0 %v744, 64
    %v748 = vpop.permute.xlu0 %747
    %v750 = vmul.f32 %v741, %v748
    %752 = vrot.lane.b32.xlu0 %v750, 64
    %v753 = vpop.permute.xlu0 %752
    %v755 = vadd.f32 %v745, %v753
    %v756 = vtanh.pop %v755
    %758 = vrot.lane.b32.xlu0 %v756, 64
    %v759 = vpop.permute.xlu0 %758
    %v761 = vmul.f32 %v743, %v759
    %762 = vst.msk [vmem:[#allocation3 + $0xc] sm:$0x3] %vm256, %v761
    %763 = vst.msk [vmem:[#allocation3 + $0x2] sm:$0x3] %vm258, %v761
    %v764 = vpack.c.bf16 %v761, %v761
    %v765 = vld [vmem:[#allocation2 + $0x10] sm:$0xc0]
    %v766 = vld [vmem:[#allocation2 + $0x18] sm:$0xc0]
    %v769 = vrot.slane %v765, 6
    %v770 = vrot.slane %v766, 6
    %v774 = vsel %vm181, %v764, 0
    %776 = vmatprep.subr.bf16.mxu0 %v166
    %777 = vmatpush1.bf16.msra.mxu0 %v165
    %778 = vmatprep.subr.bf16.mxu0 %v168
    %779 = vmatpush1.bf16.msra.mxu0 %v167
    %780 = vmatprep.subr.bf16.mxu0 %v170
    %781 = vmatpush1.bf16.msra.mxu0 %v169
    %782 = vmatprep.subr.bf16.mxu0 %v172
    %783 = vmatpush1.bf16.msra.mxu0 %v171
    %784 = vmatprep.subr.bf16.mxu0 0
    %785 = vmatpush1.bf16.msra.mxu0 0
    %786 = vmatprep.subr.bf16.mxu0 0
    %787 = vmatpush1.bf16.msra.mxu0 0
    %788 = vmatprep.subr.bf16.mxu0 0
    %789 = vmatpush1.bf16.msra.mxu0 0
    %790 = vmatprep.subr.bf16.mxu0 0
    %791 = vmatpush1.bf16.msra.mxu0 0
    %792 = vmatprep.subr.bf16.mxu0 0
    %793 = vmatpush1.bf16.msra.mxu0 0
    %794 = vmatprep.subr.bf16.mxu0 0
    %795 = vmatpush1.bf16.msra.mxu0 0
    %796 = vmatprep.subr.bf16.mxu0 0
    %797 = vmatpush1.bf16.msra.mxu0 0
    %798 = vmatprep.subr.bf16.mxu0 0
    %799 = vmatpush1.bf16.msra.mxu0 0
    %800 = vmatprep.subr.bf16.mxu0 0
    %801 = vmatpush1.bf16.msra.mxu0 0
    %802 = vmatprep.subr.bf16.mxu0 0
    %803 = vmatpush1.bf16.msra.mxu0 0
    %804 = vmatprep.subr.bf16.mxu0 0
    %805 = vmatpush1.bf16.msra.mxu0 0
    %806 = vmatprep.subr.bf16.mxu0 0
    %807 = vmatpush1.bf16.msra.mxu0 0
    %808 = vmatprep.mubr.bf16.mxu0 0
    %809 = vmatmul.mubr.bf16.gmra.mrb[0].mxu0 %v774
    %v810 = vpop.f32.mrb[0].mxu0
    %v811 = vadd.f32 %v769, %v810
    %v812 = vpop.f32.mrb[0].mxu0
    %v813 = vadd.f32 %v770, %v812
    %v814 = vpop.f32.mrb[0].mxu0
    %v815 = vpop.f32.mrb[0].mxu0
    %816 = vdwg.mxu0
    %v817 = vxor.u32 %v811, 2147483648
    %v818 = vxor.u32 %v813, 2147483648
    %v819 = vmul.f32 %v817, 1.442695
    %v820 = vpow.pop %v819
    %v821 = vmul.f32 %v818, 1.442695
    %v822 = vpow.pop %v821
    %v823 = vadd.f32 %v820, 1.0
    %v824 = vadd.f32 %v822, 1.0
    %v825 = vrcp.pop %v823
    %v826 = vmul.f32 1.0, %v825
    %v827 = vrcp.pop %v824
    %v828 = vmul.f32 1.0, %v827
    %v829 = vtanh.pop %v813
    %v830 = vmul.f32 %v826, %v755
    %832 = vrot.lane.b32.xlu0 %v829, 64
    %v833 = vpop.permute.xlu0 %832
    %v835 = vmul.f32 %v826, %v833
    %837 = vrot.lane.b32.xlu0 %v835, 64
    %v838 = vpop.permute.xlu0 %837
    %v840 = vadd.f32 %v830, %v838
    %v841 = vtanh.pop %v840
    %843 = vrot.lane.b32.xlu0 %v841, 64
    %v844 = vpop.permute.xlu0 %843
    %v846 = vmul.f32 %v828, %v844
    %847 = vst.msk [vmem:[#allocation3 + $0xe] sm:$0x3] %vm256, %v846
    %848 = vst.msk [vmem:[#allocation3] sm:$0x3] %vm258, %v846
    %v849 = vld [vmem:[#allocation3] sm:$0xff]
    %v850 = vld [vmem:[#allocation3 + $0x8] sm:$0xff]
    %v851 = vld [vmem:[%s4] sm:$0xff]
    %v852 = vld [vmem:[%s4 + $0x8] sm:$0xff]
    %v853 = vld [vmem:[%s4 + $0x10] sm:$0xff]
    %v854 = vld [vmem:[%s4 + $0x18] sm:$0xff]
    %v855 = vld [vmem:[%s4 + $0x20] sm:$0xff]
    %v856 = vld [vmem:[%s4 + $0x28] sm:$0xff]
    %v857 = vld [vmem:[%s4 + $0x30] sm:$0xff]
    %v858 = vld [vmem:[%s4 + $0x38] sm:$0xff]
    %v859 = vld [vmem:[%s5] sm:$0x1]
    %v861 = vlaneseq
    %v862 = vshrl.u32 %v861, 7
    %v863 = vsub.s32 0, %v862
    %v864 = vrot.slane %v859, %v863
    %v867 = vsel %vm181, %v849, 0
    %v870 = vsel %vm181, %v850, 0
    %872 = vmatprep.subr.mxu0 0.0
    %873 = vmatpush1.msra.mxu0 %v851
    %874 = vmatprep.subr.mxu0 0.0
    %875 = vmatpush1.msra.mxu0 %v852
    %876 = vmatprep.subr.mxu0 0.0
    %877 = vmatpush1.msra.mxu0 %v853
    %878 = vmatprep.subr.mxu0 0.0
    %879 = vmatpush1.msra.mxu0 %v854
    %880 = vmatprep.subr.mxu0 0.0
    %881 = vmatpush1.msra.mxu0 %v855
    %882 = vmatprep.subr.mxu0 0.0
    %883 = vmatpush1.msra.mxu0 %v856
    %884 = vmatprep.subr.mxu0 0.0
    %885 = vmatpush1.msra.mxu0 %v857
    %886 = vmatprep.subr.mxu0 0.0
    %887 = vmatpush1.msra.mxu0 %v858
    %888 = vmatprep.subr.mxu0 0.0
    %889 = vmatpush1.msra.mxu0 0.0
    %890 = vmatprep.subr.mxu0 0.0
    %891 = vmatpush1.msra.mxu0 0.0
    %892 = vmatprep.subr.mxu0 0.0
    %893 = vmatpush1.msra.mxu0 0.0
    %894 = vmatprep.subr.mxu0 0.0
    %895 = vmatpush1.msra.mxu0 0.0
    %896 = vmatprep.subr.mxu0 0.0
    %897 = vmatpush1.msra.mxu0 0.0
    %898 = vmatprep.subr.mxu0 0.0
    %899 = vmatpush1.msra.mxu0 0.0
    %900 = vmatprep.subr.mxu0 0.0
    %901 = vmatpush1.msra.mxu0 0.0
    %902 = vmatprep.subr.mxu0 0.0
    %903 = vmatpush1.msra.mxu0 0.0
    %904 = vmatprep.subr.mxu0 0.0
    %905 = vmatpush1.msra.mxu0 0.0
    %906 = vmatprep.subr.mxu0 0.0
    %907 = vmatpush1.msra.mxu0 0.0
    %908 = vmatprep.subr.mxu0 0.0
    %909 = vmatpush1.msra.mxu0 0.0
    %910 = vmatprep.subr.mxu0 0.0
    %911 = vmatpush1.msra.mxu0 0.0
    %912 = vmatprep.subr.mxu0 0.0
    %913 = vmatpush1.msra.mxu0 0.0
    %914 = vmatprep.subr.mxu0 0.0
    %915 = vmatpush1.msra.mxu0 0.0
    %916 = vmatprep.subr.mxu0 0.0
    %917 = vmatpush1.msra.mxu0 0.0
    %918 = vmatprep.subr.mxu0 0.0
    %919 = vmatpush1.msra.mxu0 0.0
    %920 = vmatprep.subr.mxu0 0.0
    %921 = vmatpush1.msra.mxu0 0.0
    %922 = vmatprep.subr.mxu0 0.0
    %923 = vmatpush1.msra.mxu0 0.0
    %924 = vmatprep.subr.mxu0 0.0
    %925 = vmatpush1.msra.mxu0 0.0
    %926 = vmatprep.subr.mxu0 0.0
    %927 = vmatpush1.msra.mxu0 0.0
    %928 = vmatprep.subr.mxu0 0.0
    %929 = vmatpush1.msra.mxu0 0.0
    %930 = vmatprep.subr.mxu0 0.0
    %931 = vmatpush1.msra.mxu0 0.0
    %932 = vmatprep.subr.mxu0 0.0
    %933 = vmatpush1.msra.mxu0 0.0
    %934 = vmatprep.subr.mxu0 0.0
    %935 = vmatpush1.msra.mxu0 0.0
    %936 = vmatprep.mubr.f32.mxu0 0.0
    %937 = vmatmul.mubr.f32.gmra.mrb[0].mxu0 %v867
    %v938 = vpop.f32.mrb[0].mxu0
    %v939 = vadd.f32 %v864, %v938
    %v940 = vpop.f32.mrb[0].mxu0
    %941 = vmatprep.mubr.f32.mxu0 0.0
    %942 = vmatmul.mubr.f32.gmra.mrb[0].mxu0 %v870
    %v943 = vpop.f32.mrb[0].mxu0
    %v944 = vadd.f32 %v864, %v943
    %v945 = vpop.f32.mrb[0].mxu0
    %946 = vdwg.mxu0
    %vm947 = vcmask 39936
    %948 = vst.msk [vmem:[%s9] sm:$0xff] %vm947, %v939
    %949 = vst.msk [vmem:[%s9 + $0x8] sm:$0xff] %vm947, %v944
    %v950 = vld [vmem:[%s7] sm:$0x1f]
    %v951 = vlaneseq
    %v952 = vand.u32 %v951, 127
    %v953 = vld [vmem:[%s6] sm:$0x1]
    %v955 = vlaneseq
    %v956 = vshrl.u32 %v955, 7
    %v957 = vsub.s32 0, %v956
    %v958 = vrot.slane %v953, %v957
    %v960 = vadd.f32 %v958, %v939
    %v963 = vunpack.c.l.s4 1966171168
    %v964 = vunpack.c.0.s8 %v963
    %v965 = vlaneseq
    %v966 = vshrl.u32 %v965, 7
    %v967 = vsub.s32 %v964, %v966
    %v968 = vrot.slane %v960, %v967
    %v969 = vcombine.high %v968, %v968
    %v971 = vunpack.c.l.s4 1966171168
    %v972 = vunpack.c.0.s8 %v971
    %v973 = vlaneseq
    %v974 = vshrl.u32 %v973, 7
    %v975 = vsub.s32 %v972, %v974
    %v976 = vrot.slane %v968, %v975
    %v978 = vunpack.c.l.s4 1966171168
    %v979 = vunpack.c.0.s8 %v978
    %v980 = vlaneseq
    %v981 = vshrl.u32 %v980, 7
    %v982 = vsub.s32 %v979, %v981
    %v983 = vrot.slane %v969, %v982
    %v984 = vlaneseq
    %v985 = vshrl.u32 %v984, 7
    %v986 = vsub.s32 0, %v985
    %v987 = vrot.slane %v976, %v986
    %v988 = vlaneseq
    %v989 = vshrl.u32 %v988, 7
    %v990 = vsub.s32 0, %v989
    %v991 = vrot.slane %v983, %v990
    %v994 = vadd.f32 %v987, %v950
    %v995 = vadd.f32 %v991, %v950
    %vm996 = vcmask 36864
    %v997 = vsel %vm996, %v994, -inf
    %998 = vmax.xlane.f32.xlu0 %v997
    %v999 = vpop.xlane.xlu0 %998
    %v1000 = vsel %vm996, %v995, -inf
    %1001 = vmax.xlane.f32.xlu0 %v1000
    %v1002 = vpop.xlane.xlu0 %1001
    %vm1003 = vcmp.ge.f32.partialorder %v994, %v999
    %vm1004 = vcmp.ge.f32.partialorder %v995, %v1002
    %v1005 = vsel %vm1003, %v952, 5
    %v1006 = vsel %vm1004, %v952, 5
    %v1007 = vsel %vm996, %v1005, 2147483647
    %v1008 = vand.u32 %v1007, 65535
    %v1009 = vshra.s32 %v1007, 16
    %v1010 = vcvt.s32.f32 %v1008
    %v1011 = vcvt.s32.f32 %v1009
    %1012 = vmin.xlane.f32.xlu0 %v1011
    %v1013 = vpop.xlane.xlu0 %1012
    %vm1014 = vcmp.eq.f32.partialorder %v1011, %v1013
    %v1015 = vsel %vm1014, %v1010, inf
    %1016 = vmin.xlane.f32.xlu0 %v1015
    %v1017 = vpop.xlane.xlu0 %1016
    %v1018 = vcvt.f32.s32 %v1017
    %v1019 = vcvt.f32.s32 %v1013
    %v1020 = vshll.u32 %v1019, 16
    %v1021 = vadd.s32 %v1020, %v1018
    %v1022 = vsel %vm996, %v1006, 2147483647
    %v1023 = vand.u32 %v1022, 65535
    %v1024 = vshra.s32 %v1022, 16
    %v1025 = vcvt.s32.f32 %v1023
    %v1026 = vcvt.s32.f32 %v1024
    %1027 = vmin.xlane.f32.xlu0 %v1026
    %v1028 = vpop.xlane.xlu0 %1027
    %vm1029 = vcmp.eq.f32.partialorder %v1026, %v1028
    %v1030 = vsel %vm1029, %v1025, inf
    %1031 = vmin.xlane.f32.xlu0 %v1030
    %v1032 = vpop.xlane.xlu0 %1031
    %v1033 = vcvt.f32.s32 %v1032
    %v1034 = vcvt.f32.s32 %v1028
    %v1035 = vshll.u32 %v1034, 16
    %v1036 = vadd.s32 %v1035, %v1033
    %v1037 = vlaneseq
    %v1038 = vshrl.u32 %v1037, 7
    %v1039 = vsub.s32 %v952, %v1038
    %v1040 = vrot.slane %v1021, %v1039
    %v1041 = vlaneseq
    %v1042 = vshrl.u32 %v1041, 7
    %v1043 = vsub.s32 %v952, %v1042
    %v1044 = vrot.slane %v1036, %v1043
    %vm1045 = vcmask 1041409
    %v1046 = vsel %vm1045, %v1044, %v1040
    %vm1047 = vcmask 33792
    %1048 = vst.msk [vmem:[#allocation4 + $0x2] sm:$0x3] %vm1047, %v1046
    %v1051 = vlaneseq
    %v1052 = vshrl.u32 %v1051, 7
    %v1053 = vsub.s32 %v952, %v1052
    %v1054 = vrot.slane %v999, %v1053
    %v1055 = vlaneseq
    %v1056 = vshrl.u32 %v1055, 7
    %v1057 = vsub.s32 %v952, %v1056
    %v1058 = vrot.slane %v1002, %v1057
    %vm1059 = vcmask 1043459
    %v1060 = vsel %vm1059, %v1058, %v1054
    %v1062 = vadd.f32 %v939, %v1060
    %v1065 = vunpack.c.l.s4 1966171168
    %v1066 = vunpack.c.0.s8 %v1065
    %v1067 = vlaneseq
    %v1068 = vshrl.u32 %v1067, 7
    %v1069 = vsub.s32 %v1066, %v1068
    %v1070 = vrot.slane %v1062, %v1069
    %v1071 = vcombine.high %v1070, %v1070
    %v1073 = vunpack.c.l.s4 1966171168
    %v1074 = vunpack.c.0.s8 %v1073
    %v1075 = vlaneseq
    %v1076 = vshrl.u32 %v1075, 7
    %v1077 = vsub.s32 %v1074, %v1076
    %v1078 = vrot.slane %v1070, %v1077
    %v1080 = vunpack.c.l.s4 1966171168
    %v1081 = vunpack.c.0.s8 %v1080
    %v1082 = vlaneseq
    %v1083 = vshrl.u32 %v1082, 7
    %v1084 = vsub.s32 %v1081, %v1083
    %v1085 = vrot.slane %v1071, %v1084
    %v1086 = vcombine.high %v1078, %v1078
    %v1087 = vcombine.high %v1085, %v1085
    %v1088 = vlaneseq
    %v1089 = vshrl.u32 %v1088, 7
    %v1090 = vsub.s32 0, %v1089
    %v1091 = vrot.slane %v1086, %v1090
    %v1092 = vlaneseq
    %v1093 = vshrl.u32 %v1092, 7
    %v1094 = vsub.s32 0, %v1093
    %v1095 = vrot.slane %v1087, %v1094
    %v1098 = vadd.f32 %v1091, %v950
    %v1099 = vadd.f32 %v1095, %v950
    %v1100 = vsel %vm996, %v1098, -inf
    %1101 = vmax.xlane.f32.xlu0 %v1100
    %v1102 = vpop.xlane.xlu0 %1101
    %v1103 = vsel %vm996, %v1099, -inf
    %1104 = vmax.xlane.f32.xlu0 %v1103
    %v1105 = vpop.xlane.xlu0 %1104
    %vm1106 = vcmp.ge.f32.partialorder %v1098, %v1102
    %vm1107 = vcmp.ge.f32.partialorder %v1099, %v1105
    %v1108 = vsel %vm1106, %v952, 5
    %v1109 = vsel %vm1107, %v952, 5
    %v1110 = vsel %vm996, %v1108, 2147483647
    %v1111 = vand.u32 %v1110, 65535
    %v1112 = vshra.s32 %v1110, 16
    %v1113 = vcvt.s32.f32 %v1111
    %v1114 = vcvt.s32.f32 %v1112
    %1115 = vmin.xlane.f32.xlu0 %v1114
    %v1116 = vpop.xlane.xlu0 %1115
    %vm1117 = vcmp.eq.f32.partialorder %v1114, %v1116
    %v1118 = vsel %vm1117, %v1113, inf
    %1119 = vmin.xlane.f32.xlu0 %v1118
    %v1120 = vpop.xlane.xlu0 %1119
    %v1121 = vcvt.f32.s32 %v1120
    %v1122 = vcvt.f32.s32 %v1116
    %v1123 = vshll.u32 %v1122, 16
    %v1124 = vadd.s32 %v1123, %v1121
    %v1125 = vsel %vm996, %v1109, 2147483647
    %v1126 = vand.u32 %v1125, 65535
    %v1127 = vshra.s32 %v1125, 16
    %v1128 = vcvt.s32.f32 %v1126
    %v1129 = vcvt.s32.f32 %v1127
    %1130 = vmin.xlane.f32.xlu0 %v1129
    %v1131 = vpop.xlane.xlu0 %1130
    %vm1132 = vcmp.eq.f32.partialorder %v1129, %v1131
    %v1133 = vsel %vm1132, %v1128, inf
    %1134 = vmin.xlane.f32.xlu0 %v1133
    %v1135 = vpop.xlane.xlu0 %1134
    %v1136 = vcvt.f32.s32 %v1135
    %v1137 = vcvt.f32.s32 %v1131
    %v1138 = vshll.u32 %v1137, 16
    %v1139 = vadd.s32 %v1138, %v1136
    %v1140 = vlaneseq
    %v1141 = vshrl.u32 %v1140, 7
    %v1142 = vsub.s32 %v952, %v1141
    %v1143 = vrot.slane %v1124, %v1142
    %v1144 = vlaneseq
    %v1145 = vshrl.u32 %v1144, 7
    %v1146 = vsub.s32 %v952, %v1145
    %v1147 = vrot.slane %v1139, %v1146
    %v1148 = vsel %vm1045, %v1147, %v1143
    %1149 = vst.msk [vmem:[#allocation4 + $0x4] sm:$0x3] %vm1047, %v1148
    %v1152 = vlaneseq
    %v1153 = vshrl.u32 %v1152, 7
    %v1154 = vsub.s32 %v952, %v1153
    %v1155 = vrot.slane %v1102, %v1154
    %v1156 = vlaneseq
    %v1157 = vshrl.u32 %v1156, 7
    %v1158 = vsub.s32 %v952, %v1157
    %v1159 = vrot.slane %v1105, %v1158
    %vm1160 = vcmask 1045509
    %v1161 = vsel %vm1160, %v1159, %v1155
    %v1163 = vadd.f32 %v939, %v1161
    %v1165 = vcombine.high %v1163, %v1163
    %v1167 = vunpack.c.l.s4 1966171168
    %v1168 = vunpack.c.0.s8 %v1167
    %v1169 = vlaneseq
    %v1170 = vshrl.u32 %v1169, 7
    %v1171 = vsub.s32 %v1168, %v1170
    %v1172 = vrot.slane %v1165, %v1171
    %v1173 = vcombine.high %v1172, %v1172
    %v1175 = vunpack.c.l.s4 1966171168
    %v1176 = vunpack.c.0.s8 %v1175
    %v1177 = vlaneseq
    %v1178 = vshrl.u32 %v1177, 7
    %v1179 = vsub.s32 %v1176, %v1178
    %v1180 = vrot.slane %v1172, %v1179
    %v1182 = vunpack.c.l.s4 1966171168
    %v1183 = vunpack.c.0.s8 %v1182
    %v1184 = vlaneseq
    %v1185 = vshrl.u32 %v1184, 7
    %v1186 = vsub.s32 %v1183, %v1185
    %v1187 = vrot.slane %v1173, %v1186
    %v1188 = vlaneseq
    %v1189 = vshrl.u32 %v1188, 7
    %v1190 = vsub.s32 0, %v1189
    %v1191 = vrot.slane %v1180, %v1190
    %v1192 = vlaneseq
    %v1193 = vshrl.u32 %v1192, 7
    %v1194 = vsub.s32 0, %v1193
    %v1195 = vrot.slane %v1187, %v1194
    %v1198 = vadd.f32 %v1191, %v950
    %v1199 = vadd.f32 %v1195, %v950
    %v1200 = vsel %vm996, %v1198, -inf
    %1201 = vmax.xlane.f32.xlu0 %v1200
    %v1202 = vpop.xlane.xlu0 %1201
    %v1203 = vsel %vm996, %v1199, -inf
    %1204 = vmax.xlane.f32.xlu0 %v1203
    %v1205 = vpop.xlane.xlu0 %1204
    %vm1206 = vcmp.ge.f32.partialorder %v1198, %v1202
    %vm1207 = vcmp.ge.f32.partialorder %v1199, %v1205
    %v1208 = vsel %vm1206, %v952, 5
    %v1209 = vsel %vm1207, %v952, 5
    %v1210 = vsel %vm996, %v1208, 2147483647
    %v1211 = vand.u32 %v1210, 65535
    %v1212 = vshra.s32 %v1210, 16
    %v1213 = vcvt.s32.f32 %v1211
    %v1214 = vcvt.s32.f32 %v1212
    %1215 = vmin.xlane.f32.xlu0 %v1214
    %v1216 = vpop.xlane.xlu0 %1215
    %vm1217 = vcmp.eq.f32.partialorder %v1214, %v1216
    %v1218 = vsel %vm1217, %v1213, inf
    %1219 = vmin.xlane.f32.xlu0 %v1218
    %v1220 = vpop.xlane.xlu0 %1219
    %v1221 = vcvt.f32.s32 %v1220
    %v1222 = vcvt.f32.s32 %v1216
    %v1223 = vshll.u32 %v1222, 16
    %v1224 = vadd.s32 %v1223, %v1221
    %v1225 = vsel %vm996, %v1209, 2147483647
    %v1226 = vand.u32 %v1225, 65535
    %v1227 = vshra.s32 %v1225, 16
    %v1228 = vcvt.s32.f32 %v1226
    %v1229 = vcvt.s32.f32 %v1227
    %1230 = vmin.xlane.f32.xlu0 %v1229
    %v1231 = vpop.xlane.xlu0 %1230
    %vm1232 = vcmp.eq.f32.partialorder %v1229, %v1231
    %v1233 = vsel %vm1232, %v1228, inf
    %1234 = vmin.xlane.f32.xlu0 %v1233
    %v1235 = vpop.xlane.xlu0 %1234
    %v1236 = vcvt.f32.s32 %v1235
    %v1237 = vcvt.f32.s32 %v1231
    %v1238 = vshll.u32 %v1237, 16
    %v1239 = vadd.s32 %v1238, %v1236
    %v1240 = vlaneseq
    %v1241 = vshrl.u32 %v1240, 7
    %v1242 = vsub.s32 %v952, %v1241
    %v1243 = vrot.slane %v1224, %v1242
    %v1244 = vlaneseq
    %v1245 = vshrl.u32 %v1244, 7
    %v1246 = vsub.s32 %v952, %v1245
    %v1247 = vrot.slane %v1239, %v1246
    %v1248 = vsel %vm1045, %v1247, %v1243
    %1249 = vst.msk [vmem:[#allocation4 + $0x6] sm:$0x3] %vm1047, %v1248
    %v1252 = vlaneseq
    %v1253 = vshrl.u32 %v1252, 7
    %v1254 = vsub.s32 %v952, %v1253
    %v1255 = vrot.slane %v1202, %v1254
    %v1256 = vlaneseq
    %v1257 = vshrl.u32 %v1256, 7
    %v1258 = vsub.s32 %v952, %v1257
    %v1259 = vrot.slane %v1205, %v1258
    %vm1260 = vcmask 1047559
    %v1261 = vsel %vm1260, %v1259, %v1255
    %v1263 = vadd.f32 %v939, %v1261
    %v1265 = vcombine.high %v1263, %v1263
    %v1267 = vunpack.c.l.s4 1966171168
    %v1268 = vunpack.c.0.s8 %v1267
    %v1269 = vlaneseq
    %v1270 = vshrl.u32 %v1269, 7
    %v1271 = vsub.s32 %v1268, %v1270
    %v1272 = vrot.slane %v1265, %v1271
    %v1273 = vcombine.high %v1272, %v1272
    %v1275 = vunpack.c.l.s4 1966171168
    %v1276 = vunpack.c.0.s8 %v1275
    %v1277 = vlaneseq
    %v1278 = vshrl.u32 %v1277, 7
    %v1279 = vsub.s32 %v1276, %v1278
    %v1280 = vrot.slane %v1272, %v1279
    %v1282 = vunpack.c.l.s4 1966171168
    %v1283 = vunpack.c.0.s8 %v1282
    %v1284 = vlaneseq
    %v1285 = vshrl.u32 %v1284, 7
    %v1286 = vsub.s32 %v1283, %v1285
    %v1287 = vrot.slane %v1273, %v1286
    %v1288 = vcombine.high %v1280, %v1280
    %v1289 = vcombine.high %v1287, %v1287
    %v1290 = vlaneseq
    %v1291 = vshrl.u32 %v1290, 7
    %v1292 = vsub.s32 0, %v1291
    %v1293 = vrot.slane %v1288, %v1292
    %v1294 = vlaneseq
    %v1295 = vshrl.u32 %v1294, 7
    %v1296 = vsub.s32 0, %v1295
    %v1297 = vrot.slane %v1289, %v1296
    %v1300 = vadd.f32 %v1293, %v950
    %v1301 = vadd.f32 %v1297, %v950
    %v1302 = vsel %vm996, %v1300, -inf
    %1303 = vmax.xlane.f32.xlu0 %v1302
    %v1304 = vpop.xlane.xlu0 %1303
    %v1305 = vsel %vm996, %v1301, -inf
    %1306 = vmax.xlane.f32.xlu0 %v1305
    %v1307 = vpop.xlane.xlu0 %1306
    %vm1308 = vcmp.ge.f32.partialorder %v1300, %v1304
    %vm1309 = vcmp.ge.f32.partialorder %v1301, %v1307
    %v1310 = vsel %vm1308, %v952, 5
    %v1311 = vsel %vm1309, %v952, 5
    %v1312 = vsel %vm996, %v1310, 2147483647
    %v1313 = vand.u32 %v1312, 65535
    %v1314 = vshra.s32 %v1312, 16
    %v1315 = vcvt.s32.f32 %v1313
    %v1316 = vcvt.s32.f32 %v1314
    %1317 = vmin.xlane.f32.xlu0 %v1316
    %v1318 = vpop.xlane.xlu0 %1317
    %vm1319 = vcmp.eq.f32.partialorder %v1316, %v1318
    %v1320 = vsel %vm1319, %v1315, inf
    %1321 = vmin.xlane.f32.xlu0 %v1320
    %v1322 = vpop.xlane.xlu0 %1321
    %v1323 = vcvt.f32.s32 %v1322
    %v1324 = vcvt.f32.s32 %v1318
    %v1325 = vshll.u32 %v1324, 16
    %v1326 = vadd.s32 %v1325, %v1323
    %v1327 = vsel %vm996, %v1311, 2147483647
    %v1328 = vand.u32 %v1327, 65535
    %v1329 = vshra.s32 %v1327, 16
    %v1330 = vcvt.s32.f32 %v1328
    %v1331 = vcvt.s32.f32 %v1329
    %1332 = vmin.xlane.f32.xlu0 %v1331
    %v1333 = vpop.xlane.xlu0 %1332
    %vm1334 = vcmp.eq.f32.partialorder %v1331, %v1333
    %v1335 = vsel %vm1334, %v1330, inf
    %1336 = vmin.xlane.f32.xlu0 %v1335
    %v1337 = vpop.xlane.xlu0 %1336
    %v1338 = vcvt.f32.s32 %v1337
    %v1339 = vcvt.f32.s32 %v1333
    %v1340 = vshll.u32 %v1339, 16
    %v1341 = vadd.s32 %v1340, %v1338
    %v1342 = vlaneseq
    %v1343 = vshrl.u32 %v1342, 7
    %v1344 = vsub.s32 %v952, %v1343
    %v1345 = vrot.slane %v1326, %v1344
    %v1346 = vlaneseq
    %v1347 = vshrl.u32 %v1346, 7
    %v1348 = vsub.s32 %v952, %v1347
    %v1349 = vrot.slane %v1341, %v1348
    %v1350 = vsel %vm1045, %v1349, %v1345
    %1351 = vst.msk [vmem:[#allocation4 + $0x8] sm:$0x3] %vm1047, %v1350
    %v1354 = vlaneseq
    %v1355 = vshrl.u32 %v1354, 7
    %v1356 = vsub.s32 %v952, %v1355
    %v1357 = vrot.slane %v1304, %v1356
    %v1358 = vlaneseq
    %v1359 = vshrl.u32 %v1358, 7
    %v1360 = vsub.s32 %v952, %v1359
    %v1361 = vrot.slane %v1307, %v1360
    %v1362 = vsel %vm1045, %v1361, %v1357
    %v1364 = vadd.f32 %v944, %v1362
    %v1367 = vunpack.c.l.s4 1966171168
    %v1368 = vunpack.c.0.s8 %v1367
    %v1369 = vlaneseq
    %v1370 = vshrl.u32 %v1369, 7
    %v1371 = vsub.s32 %v1368, %v1370
    %v1372 = vrot.slane %v1364, %v1371
    %v1373 = vcombine.high %v1372, %v1372
    %v1375 = vunpack.c.l.s4 1966171168
    %v1376 = vunpack.c.0.s8 %v1375
    %v1377 = vlaneseq
    %v1378 = vshrl.u32 %v1377, 7
    %v1379 = vsub.s32 %v1376, %v1378
    %v1380 = vrot.slane %v1372, %v1379
    %v1382 = vunpack.c.l.s4 1966171168
    %v1383 = vunpack.c.0.s8 %v1382
    %v1384 = vlaneseq
    %v1385 = vshrl.u32 %v1384, 7
    %v1386 = vsub.s32 %v1383, %v1385
    %v1387 = vrot.slane %v1373, %v1386
    %v1388 = vlaneseq
    %v1389 = vshrl.u32 %v1388, 7
    %v1390 = vsub.s32 0, %v1389
    %v1391 = vrot.slane %v1380, %v1390
    %v1392 = vlaneseq
    %v1393 = vshrl.u32 %v1392, 7
    %v1394 = vsub.s32 0, %v1393
    %v1395 = vrot.slane %v1387, %v1394
    %v1398 = vadd.f32 %v1391, %v950
    %v1399 = vadd.f32 %v1395, %v950
    %v1400 = vsel %vm996, %v1398, -inf
    %1401 = vmax.xlane.f32.xlu0 %v1400
    %v1402 = vpop.xlane.xlu0 %1401
    %v1403 = vsel %vm996, %v1399, -inf
    %1404 = vmax.xlane.f32.xlu0 %v1403
    %v1405 = vpop.xlane.xlu0 %1404
    %vm1406 = vcmp.ge.f32.partialorder %v1398, %v1402
    %vm1407 = vcmp.ge.f32.partialorder %v1399, %v1405
    %v1408 = vsel %vm1406, %v952, 5
    %v1409 = vsel %vm1407, %v952, 5
    %v1410 = vsel %vm996, %v1408, 2147483647
    %v1411 = vand.u32 %v1410, 65535
    %v1412 = vshra.s32 %v1410, 16
    %v1413 = vcvt.s32.f32 %v1411
    %v1414 = vcvt.s32.f32 %v1412
    %1415 = vmin.xlane.f32.xlu0 %v1414
    %v1416 = vpop.xlane.xlu0 %1415
    %vm1417 = vcmp.eq.f32.partialorder %v1414, %v1416
    %v1418 = vsel %vm1417, %v1413, inf
    %1419 = vmin.xlane.f32.xlu0 %v1418
    %v1420 = vpop.xlane.xlu0 %1419
    %v1421 = vcvt.f32.s32 %v1420
    %v1422 = vcvt.f32.s32 %v1416
    %v1423 = vshll.u32 %v1422, 16
    %v1424 = vadd.s32 %v1423, %v1421
    %v1425 = vsel %vm996, %v1409, 2147483647
    %v1426 = vand.u32 %v1425, 65535
    %v1427 = vshra.s32 %v1425, 16
    %v1428 = vcvt.s32.f32 %v1426
    %v1429 = vcvt.s32.f32 %v1427
    %1430 = vmin.xlane.f32.xlu0 %v1429
    %v1431 = vpop.xlane.xlu0 %1430
    %vm1432 = vcmp.eq.f32.partialorder %v1429, %v1431
    %v1433 = vsel %vm1432, %v1428, inf
    %1434 = vmin.xlane.f32.xlu0 %v1433
    %v1435 = vpop.xlane.xlu0 %1434
    %v1436 = vcvt.f32.s32 %v1435
    %v1437 = vcvt.f32.s32 %v1431
    %v1438 = vshll.u32 %v1437, 16
    %v1439 = vadd.s32 %v1438, %v1436
    %v1440 = vlaneseq
    %v1441 = vshrl.u32 %v1440, 7
    %v1442 = vsub.s32 %v952, %v1441
    %v1443 = vrot.slane %v1424, %v1442
    %v1444 = vlaneseq
    %v1445 = vshrl.u32 %v1444, 7
    %v1446 = vsub.s32 %v952, %v1445
    %v1447 = vrot.slane %v1439, %v1446
    %v1448 = vsel %vm1045, %v1447, %v1443
    %1449 = vst.msk [vmem:[#allocation4 + $0xa] sm:$0x3] %vm1047, %v1448
    %v1452 = vlaneseq
    %v1453 = vshrl.u32 %v1452, 7
    %v1454 = vsub.s32 %v952, %v1453
    %v1455 = vrot.slane %v1402, %v1454
    %v1456 = vlaneseq
    %v1457 = vshrl.u32 %v1456, 7
    %v1458 = vsub.s32 %v952, %v1457
    %v1459 = vrot.slane %v1405, %v1458
    %v1460 = vsel %vm1059, %v1459, %v1455
    %v1462 = vadd.f32 %v944, %v1460
    %v1465 = vunpack.c.l.s4 1966171168
    %v1466 = vunpack.c.0.s8 %v1465
    %v1467 = vlaneseq
    %v1468 = vshrl.u32 %v1467, 7
    %v1469 = vsub.s32 %v1466, %v1468
    %v1470 = vrot.slane %v1462, %v1469
    %v1471 = vcombine.high %v1470, %v1470
    %v1473 = vunpack.c.l.s4 1966171168
    %v1474 = vunpack.c.0.s8 %v1473
    %v1475 = vlaneseq
    %v1476 = vshrl.u32 %v1475, 7
    %v1477 = vsub.s32 %v1474, %v1476
    %v1478 = vrot.slane %v1470, %v1477
    %v1480 = vunpack.c.l.s4 1966171168
    %v1481 = vunpack.c.0.s8 %v1480
    %v1482 = vlaneseq
    %v1483 = vshrl.u32 %v1482, 7
    %v1484 = vsub.s32 %v1481, %v1483
    %v1485 = vrot.slane %v1471, %v1484
    %v1486 = vcombine.high %v1478, %v1478
    %v1487 = vcombine.high %v1485, %v1485
    %v1488 = vlaneseq
    %v1489 = vshrl.u32 %v1488, 7
    %v1490 = vsub.s32 0, %v1489
    %v1491 = vrot.slane %v1486, %v1490
    %v1492 = vlaneseq
    %v1493 = vshrl.u32 %v1492, 7
    %v1494 = vsub.s32 0, %v1493
    %v1495 = vrot.slane %v1487, %v1494
    %v1498 = vadd.f32 %v1491, %v950
    %v1499 = vadd.f32 %v1495, %v950
    %v1500 = vsel %vm996, %v1498, -inf
    %1501 = vmax.xlane.f32.xlu0 %v1500
    %v1502 = vpop.xlane.xlu0 %1501
    %v1503 = vsel %vm996, %v1499, -inf
    %1504 = vmax.xlane.f32.xlu0 %v1503
    %v1505 = vpop.xlane.xlu0 %1504
    %vm1506 = vcmp.ge.f32.partialorder %v1498, %v1502
    %vm1507 = vcmp.ge.f32.partialorder %v1499, %v1505
    %v1508 = vsel %vm1506, %v952, 5
    %v1509 = vsel %vm1507, %v952, 5
    %v1510 = vsel %vm996, %v1508, 2147483647
    %v1511 = vand.u32 %v1510, 65535
    %v1512 = vshra.s32 %v1510, 16
    %v1513 = vcvt.s32.f32 %v1511
    %v1514 = vcvt.s32.f32 %v1512
    %1515 = vmin.xlane.f32.xlu0 %v1514
    %v1516 = vpop.xlane.xlu0 %1515
    %vm1517 = vcmp.eq.f32.partialorder %v1514, %v1516
    %v1518 = vsel %vm1517, %v1513, inf
    %1519 = vmin.xlane.f32.xlu0 %v1518
    %v1520 = vpop.xlane.xlu0 %1519
    %v1521 = vcvt.f32.s32 %v1520
    %v1522 = vcvt.f32.s32 %v1516
    %v1523 = vshll.u32 %v1522, 16
    %v1524 = vadd.s32 %v1523, %v1521
    %v1525 = vsel %vm996, %v1509, 2147483647
    %v1526 = vand.u32 %v1525, 65535
    %v1527 = vshra.s32 %v1525, 16
    %v1528 = vcvt.s32.f32 %v1526
    %v1529 = vcvt.s32.f32 %v1527
    %1530 = vmin.xlane.f32.xlu0 %v1529
    %v1531 = vpop.xlane.xlu0 %1530
    %vm1532 = vcmp.eq.f32.partialorder %v1529, %v1531
    %v1533 = vsel %vm1532, %v1528, inf
    %1534 = vmin.xlane.f32.xlu0 %v1533
    %v1535 = vpop.xlane.xlu0 %1534
    %v1536 = vcvt.f32.s32 %v1535
    %v1537 = vcvt.f32.s32 %v1531
    %v1538 = vshll.u32 %v1537, 16
    %v1539 = vadd.s32 %v1538, %v1536
    %v1540 = vlaneseq
    %v1541 = vshrl.u32 %v1540, 7
    %v1542 = vsub.s32 %v952, %v1541
    %v1543 = vrot.slane %v1524, %v1542
    %v1544 = vlaneseq
    %v1545 = vshrl.u32 %v1544, 7
    %v1546 = vsub.s32 %v952, %v1545
    %v1547 = vrot.slane %v1539, %v1546
    %v1548 = vsel %vm1045, %v1547, %v1543
    %1549 = vst.msk [vmem:[#allocation4 + $0xc] sm:$0x3] %vm1047, %v1548
    %v1552 = vlaneseq
    %v1553 = vshrl.u32 %v1552, 7
    %v1554 = vsub.s32 %v952, %v1553
    %v1555 = vrot.slane %v1502, %v1554
    %v1556 = vlaneseq
    %v1557 = vshrl.u32 %v1556, 7
    %v1558 = vsub.s32 %v952, %v1557
    %v1559 = vrot.slane %v1505, %v1558
    %v1560 = vsel %vm1160, %v1559, %v1555
    %v1562 = vadd.f32 %v944, %v1560
    %v1564 = vcombine.high %v1562, %v1562
    %v1566 = vunpack.c.l.s4 1966171168
    %v1567 = vunpack.c.0.s8 %v1566
    %v1568 = vlaneseq
    %v1569 = vshrl.u32 %v1568, 7
    %v1570 = vsub.s32 %v1567, %v1569
    %v1571 = vrot.slane %v1564, %v1570
    %v1572 = vcombine.high %v1571, %v1571
    %v1574 = vunpack.c.l.s4 1966171168
    %v1575 = vunpack.c.0.s8 %v1574
    %v1576 = vlaneseq
    %v1577 = vshrl.u32 %v1576, 7
    %v1578 = vsub.s32 %v1575, %v1577
    %v1579 = vrot.slane %v1571, %v1578
    %v1581 = vunpack.c.l.s4 1966171168
    %v1582 = vunpack.c.0.s8 %v1581
    %v1583 = vlaneseq
    %v1584 = vshrl.u32 %v1583, 7
    %v1585 = vsub.s32 %v1582, %v1584
    %v1586 = vrot.slane %v1572, %v1585
    %v1587 = vlaneseq
    %v1588 = vshrl.u32 %v1587, 7
    %v1589 = vsub.s32 0, %v1588
    %v1590 = vrot.slane %v1579, %v1589
    %v1591 = vlaneseq
    %v1592 = vshrl.u32 %v1591, 7
    %v1593 = vsub.s32 0, %v1592
    %v1594 = vrot.slane %v1586, %v1593
    %v1597 = vadd.f32 %v1590, %v950
    %v1598 = vadd.f32 %v1594, %v950
    %v1599 = vsel %vm996, %v1597, -inf
    %1600 = vmax.xlane.f32.xlu0 %v1599
    %v1601 = vpop.xlane.xlu0 %1600
    %v1602 = vsel %vm996, %v1598, -inf
    %1603 = vmax.xlane.f32.xlu0 %v1602
    %v1604 = vpop.xlane.xlu0 %1603
    %vm1605 = vcmp.ge.f32.partialorder %v1597, %v1601
    %vm1606 = vcmp.ge.f32.partialorder %v1598, %v1604
    %v1607 = vsel %vm1605, %v952, 5
    %v1608 = vsel %vm1606, %v952, 5
    %v1609 = vsel %vm996, %v1607, 2147483647
    %v1610 = vand.u32 %v1609, 65535
    %v1611 = vshra.s32 %v1609, 16
    %v1612 = vcvt.s32.f32 %v1610
    %v1613 = vcvt.s32.f32 %v1611
    %1614 = vmin.xlane.f32.xlu0 %v1613
    %v1615 = vpop.xlane.xlu0 %1614
    %vm1616 = vcmp.eq.f32.partialorder %v1613, %v1615
    %v1617 = vsel %vm1616, %v1612, inf
    %1618 = vmin.xlane.f32.xlu0 %v1617
    %v1619 = vpop.xlane.xlu0 %1618
    %v1620 = vcvt.f32.s32 %v1619
    %v1621 = vcvt.f32.s32 %v1615
    %v1622 = vshll.u32 %v1621, 16
    %v1623 = vadd.s32 %v1622, %v1620
    %v1624 = vsel %vm996, %v1608, 2147483647
    %v1625 = vand.u32 %v1624, 65535
    %v1626 = vshra.s32 %v1624, 16
    %v1627 = vcvt.s32.f32 %v1625
    %v1628 = vcvt.s32.f32 %v1626
    %1629 = vmin.xlane.f32.xlu0 %v1628
    %v1630 = vpop.xlane.xlu0 %1629
    %vm1631 = vcmp.eq.f32.partialorder %v1628, %v1630
    %v1632 = vsel %vm1631, %v1627, inf
    %1633 = vmin.xlane.f32.xlu0 %v1632
    %v1634 = vpop.xlane.xlu0 %1633
    %v1635 = vcvt.f32.s32 %v1634
    %v1636 = vcvt.f32.s32 %v1630
    %v1637 = vshll.u32 %v1636, 16
    %v1638 = vadd.s32 %v1637, %v1635
    %v1639 = vlaneseq
    %v1640 = vshrl.u32 %v1639, 7
    %v1641 = vsub.s32 %v952, %v1640
    %v1642 = vrot.slane %v1623, %v1641
    %v1643 = vlaneseq
    %v1644 = vshrl.u32 %v1643, 7
    %v1645 = vsub.s32 %v952, %v1644
    %v1646 = vrot.slane %v1638, %v1645
    %v1647 = vsel %vm1045, %v1646, %v1642
    %1648 = vst.msk [vmem:[#allocation4 + $0xe] sm:$0x3] %vm1047, %v1647
    %v1651 = vlaneseq
    %v1652 = vshrl.u32 %v1651, 7
    %v1653 = vsub.s32 %v952, %v1652
    %v1654 = vrot.slane %v1601, %v1653
    %v1655 = vlaneseq
    %v1656 = vshrl.u32 %v1655, 7
    %v1657 = vsub.s32 %v952, %v1656
    %v1658 = vrot.slane %v1604, %v1657
    %v1659 = vsel %vm1260, %v1658, %v1654
    %v1661 = vadd.f32 %v944, %v1659
    %v1662 = vld [vmem:[%s8] sm:$0x1]
    %v1664 = vlaneseq
    %v1665 = vshrl.u32 %v1664, 7
    %v1666 = vsub.s32 0, %v1665
    %v1667 = vrot.slane %v1662, %v1666
    %v1669 = vadd.f32 %v1661, %v1667
    %vm1670 = vcmask 39942
    %v1671 = vsel %vm1670, %v1669, -inf
    %1672 = vmax.xlane.f32.xlu0 %v1671
    %v1673 = vpop.xlane.xlu0 %1672
    %vm1674 = vcmask 7174
    %1675 = vst.msk [vmem:[%s11 - $0x6] sm:$0xc0] %vm1674, %v1673
    %vm1676 = vcmp.ge.f32.partialorder %v1669, %v1673
    %v1677 = vsel %vm1676, %v952, 5
    %v1678 = vsel %vm1670, %v1677, 2147483647
    %v1679 = vand.u32 %v1678, 65535
    %v1680 = vshra.s32 %v1678, 16
    %v1681 = vcvt.s32.f32 %v1679
    %v1682 = vcvt.s32.f32 %v1680
    %1683 = vmin.xlane.f32.xlu0 %v1682
    %v1684 = vpop.xlane.xlu0 %1683
    %vm1685 = vcmp.eq.f32.partialorder %v1682, %v1684
    %v1686 = vsel %vm1685, %v1681, inf
    %1687 = vmin.xlane.f32.xlu0 %v1686
    %v1688 = vpop.xlane.xlu0 %1687
    %v1689 = vcvt.f32.s32 %v1688
    %v1690 = vcvt.f32.s32 %v1684
    %v1691 = vshll.u32 %v1690, 16
    %v1692 = vadd.s32 %v1691, %v1689
    %vm1693 = vcmp.eq.s32.totalorder %v952, 7
    %v1694 = vsel %vm1693, %v1692, 0
    %v1695 = vld [vmem:[#allocation4 + $0xe] sm:$0x3]
    %vm1696 = vcmp.eq.s32.totalorder %v952, %v1692
    %v1697 = vrot.slane %v1695, 2
    %v1698 = vsel %vm1696, %v1697, 0
    %v1699 = vsel %vm1670, %v1698, 0
    %v1700 = vand.u32 %v1699, 65535
    %v1701 = vshrl.u32 %v1699, 16
    %v1702 = vcvt.s32.f32 %v1700
    %v1703 = vcvt.s32.f32 %v1701
    %1704 = vadd.xlane.f32.xlu0 %v1702
    %v1705 = vpop.xlane.xlu0 %1704
    %1706 = vadd.xlane.f32.xlu0 %v1703
    %v1707 = vpop.xlane.xlu0 %1706
    %v1708 = vcvt.f32.s32 %v1705
    %v1709 = vcvt.f32.s32 %v1707
    %v1710 = vshll.u32 %v1709, 16
    %v1711 = vadd.s32 %v1710, %v1708
    %vm1712 = vcmp.eq.s32.totalorder %v952, 6
    %v1713 = vsel %vm1712, %v1711, %v1694
    %v1714 = vld [vmem:[#allocation4 + $0xc] sm:$0x3]
    %vm1715 = vcmp.eq.s32.totalorder %v952, %v1711
    %v1716 = vrot.slane %v1714, 2
    %v1717 = vsel %vm1715, %v1716, 0
    %v1718 = vsel %vm1670, %v1717, 0
    %v1719 = vand.u32 %v1718, 65535
    %v1720 = vshrl.u32 %v1718, 16
    %v1721 = vcvt.s32.f32 %v1719
    %v1722 = vcvt.s32.f32 %v1720
    %1723 = vadd.xlane.f32.xlu0 %v1721
    %v1724 = vpop.xlane.xlu0 %1723
    %1725 = vadd.xlane.f32.xlu0 %v1722
    %v1726 = vpop.xlane.xlu0 %1725
    %v1727 = vcvt.f32.s32 %v1724
    %v1728 = vcvt.f32.s32 %v1726
    %v1729 = vshll.u32 %v1728, 16
    %v1730 = vadd.s32 %v1729, %v1727
    %vm1731 = vcmp.eq.s32.totalorder %v952, 5
    %v1732 = vsel %vm1731, %v1730, %v1713
    %v1733 = vld [vmem:[#allocation4 + $0xa] sm:$0x3]
    %vm1734 = vcmp.eq.s32.totalorder %v952, %v1730
    %v1735 = vrot.slane %v1733, 2
    %v1736 = vsel %vm1734, %v1735, 0
    %v1737 = vsel %vm1670, %v1736, 0
    %v1738 = vand.u32 %v1737, 65535
    %v1739 = vshrl.u32 %v1737, 16
    %v1740 = vcvt.s32.f32 %v1738
    %v1741 = vcvt.s32.f32 %v1739
    %1742 = vadd.xlane.f32.xlu0 %v1740
    %v1743 = vpop.xlane.xlu0 %1742
    %1744 = vadd.xlane.f32.xlu0 %v1741
    %v1745 = vpop.xlane.xlu0 %1744
    %v1746 = vcvt.f32.s32 %v1743
    %v1747 = vcvt.f32.s32 %v1745
    %v1748 = vshll.u32 %v1747, 16
    %v1749 = vadd.s32 %v1748, %v1746
    %vm1750 = vcmp.eq.s32.totalorder %v952, 4
    %v1751 = vsel %vm1750, %v1749, %v1732
    %v1752 = vld [vmem:[#allocation4 + $0x8] sm:$0x3]
    %vm1753 = vcmp.eq.s32.totalorder %v952, %v1749
    %v1754 = vrot.slane %v1752, 2
    %v1755 = vsel %vm1753, %v1754, 0
    %v1756 = vsel %vm1670, %v1755, 0
    %v1757 = vand.u32 %v1756, 65535
    %v1758 = vshrl.u32 %v1756, 16
    %v1759 = vcvt.s32.f32 %v1757
    %v1760 = vcvt.s32.f32 %v1758
    %1761 = vadd.xlane.f32.xlu0 %v1759
    %v1762 = vpop.xlane.xlu0 %1761
    %1763 = vadd.xlane.f32.xlu0 %v1760
    %v1764 = vpop.xlane.xlu0 %1763
    %v1765 = vcvt.f32.s32 %v1762
    %v1766 = vcvt.f32.s32 %v1764
    %v1767 = vshll.u32 %v1766, 16
    %v1768 = vadd.s32 %v1767, %v1765
    %vm1769 = vcmp.eq.s32.totalorder %v952, 3
    %v1770 = vsel %vm1769, %v1768, %v1751
    %v1771 = vld [vmem:[#allocation4 + $0x6] sm:$0x3]
    %vm1772 = vcmp.eq.s32.totalorder %v952, %v1768
    %v1773 = vrot.slane %v1771, 2
    %v1774 = vsel %vm1772, %v1773, 0
    %v1775 = vsel %vm1670, %v1774, 0
    %v1776 = vand.u32 %v1775, 65535
    %v1777 = vshrl.u32 %v1775, 16
    %v1778 = vcvt.s32.f32 %v1776
    %v1779 = vcvt.s32.f32 %v1777
    %1780 = vadd.xlane.f32.xlu0 %v1778
    %v1781 = vpop.xlane.xlu0 %1780
    %1782 = vadd.xlane.f32.xlu0 %v1779
    %v1783 = vpop.xlane.xlu0 %1782
    %v1784 = vcvt.f32.s32 %v1781
    %v1785 = vcvt.f32.s32 %v1783
    %v1786 = vshll.u32 %v1785, 16
    %v1787 = vadd.s32 %v1786, %v1784
    %vm1788 = vcmp.eq.s32.totalorder %v952, 2
    %v1789 = vsel %vm1788, %v1787, %v1770
    %v1790 = vld [vmem:[#allocation4 + $0x4] sm:$0x3]
    %vm1791 = vcmp.eq.s32.totalorder %v952, %v1787
    %v1792 = vrot.slane %v1790, 2
    %v1793 = vsel %vm1791, %v1792, 0
    %v1794 = vsel %vm1670, %v1793, 0
    %v1795 = vand.u32 %v1794, 65535
    %v1796 = vshrl.u32 %v1794, 16
    %v1797 = vcvt.s32.f32 %v1795
    %v1798 = vcvt.s32.f32 %v1796
    %1799 = vadd.xlane.f32.xlu0 %v1797
    %v1800 = vpop.xlane.xlu0 %1799
    %1801 = vadd.xlane.f32.xlu0 %v1798
    %v1802 = vpop.xlane.xlu0 %1801
    %v1803 = vcvt.f32.s32 %v1800
    %v1804 = vcvt.f32.s32 %v1802
    %v1805 = vshll.u32 %v1804, 16
    %v1806 = vadd.s32 %v1805, %v1803
    %vm1807 = vcmp.eq.s32.totalorder %v952, 1
    %v1808 = vsel %vm1807, %v1806, %v1789
    %v1809 = vld [vmem:[#allocation4 + $0x2] sm:$0x3]
    %vm1810 = vcmp.eq.s32.totalorder %v952, %v1806
    %v1811 = vrot.slane %v1809, 2
    %v1812 = vsel %vm1810, %v1811, 0
    %v1813 = vsel %vm1670, %v1812, 0
    %v1814 = vand.u32 %v1813, 65535
    %v1815 = vshrl.u32 %v1813, 16
    %v1816 = vcvt.s32.f32 %v1814
    %v1817 = vcvt.s32.f32 %v1815
    %1818 = vadd.xlane.f32.xlu0 %v1816
    %v1819 = vpop.xlane.xlu0 %1818
    %1820 = vadd.xlane.f32.xlu0 %v1817
    %v1821 = vpop.xlane.xlu0 %1820
    %v1822 = vcvt.f32.s32 %v1819
    %v1823 = vcvt.f32.s32 %v1821
    %v1824 = vshll.u32 %v1823, 16
    %v1825 = vadd.s32 %v1824, %v1822
    %vm1826 = vcmp.eq.s32.totalorder %v952, 0
    %v1827 = vsel %vm1826, %v1825, %v1808
    %vm1828 = vcmask 64518
    %1829 = vst.msk [vmem:[#allocation5 - $0x6] sm:$0xc0] %vm1828, %v1827
    // Predicated region
    $region38: #{_device_forward.1} parent=1 // pred_check
      _
    $region39: #{_device_forward.1} parent=1 // pred_check_branch
      %1831 = sbr.rel (0) target = $region41
    $region40: #{_device_forward.1} parent=1 // pred_region
      _
    $region41: #{_device_forward.1} parent=1 // pred_fallthru
      _
    // Predicated region
    $region42: #{_device_forward.1} parent=1 // pred_check
      _
    $region43: #{_device_forward.1} parent=1 // pred_check_branch
      %1833 = sbr.rel (0) target = $region45
    $region44: #{_device_forward.1} parent=1 // pred_region
      %s1835 = ssub.s32 32, 32
      %1836 = vsyncadd [#allocation6], %s1835
      %s1838 = sshll.u32 [#allocation5], 4
      %s1839 = int_to_ptr.vmem [resolvable:$true] %s1838
      %1841 = dma.vmem_to_hbm [thread:$0]  %s1839, 32, %s10, [#allocation6]
    $region45: #{_device_forward.1} parent=1 // pred_fallthru
      _
    // Predicated region
    $region46: #{_device_forward.1} parent=1 // pred_check
      _
    $region47: #{_device_forward.1} parent=1 // pred_check_branch
      %1843 = sbr.rel (0) target = $region49
    $region48: #{_device_forward.1} parent=1 // pred_region
      _
    $region49: #{_device_forward.1} parent=1 // pred_fallthru
      _
    // Predicated region
    $region50: #{_device_forward.1} parent=1 // pred_check
      _
    $region51: #{_device_forward.1} parent=1 // pred_check_branch
      %1845 = sbr.rel (0) target = $region53
    $region52: #{_device_forward.1} parent=1 // pred_region
      _
    $region53: #{_device_forward.1} parent=1 // pred_fallthru
      _
    // Predicated region
    $region54: #{_device_forward.1} parent=1 // pred_check
      _
    $region55: #{_device_forward.1} parent=1 // pred_check_branch
      %1847 = sbr.rel (0) target = $region57
    $region56: #{_device_forward.1} parent=1 // pred_region
      %1848 = dma.done [#allocation6], 32
    $region57: #{_device_forward.1} parent=1 // pred_fallthru
      _
    // Predicated region
    $region58: #{_device_forward.1} parent=1 // pred_check
      _
    $region59: #{_device_forward.1} parent=1 // pred_check_branch
      %1850 = sbr.rel (0) target = $region61
    $region60: #{_device_forward.1} parent=1 // pred_region
      _
    $region61: #{_device_forward.1} parent=1 // pred_fallthru
      _
    %1851 = vsyncpa [#allocation6], 1

</llo_original>
